<compile_context>
chip_gen: v6e
topology: v6e:2x2x1
jax: 0.10.0
libtpu: 0.0.40
codegen_flags: <defaults>
</compile_context>

<pallas_src>
import functools
import math

import jax
import jax.numpy as jnp
import numpy as np
from jax.experimental import pallas as pl
from jax.experimental.pallas import tpu as pltpu


def _qs_attention_kernel(spt_ref, qry_ref,
                         w_spt_ref, b_spt_ref,
                         w_qry_ref, b_qry_ref,
                         out_ref,
                         *, Bb, S, Q, Ck, K, V):
    """One grid step = Bb instances.

    spt_ref: (Bb*S, Ck)   qry_ref: (Bb*Q, Cq)
    out_ref: (Bb, Q, (S+1)*(Ck+V))   -- lane-dense flat slab per (instance, query)
    """
    spt_all = spt_ref[...]                                        # (Bb*S, Ck)

    # Two fused projections for the whole batch block (f32 MXU accumulation):
    #   proj_spt = [keys | values]              (Bb*S, K+V)
    #   proj_qry = [query/sqrt(K) | fc(qry)]    (Bb*Q, K+Ck)   (scale pre-folded)
    proj_spt = jnp.dot(spt_all, w_spt_ref[...],
                       preferred_element_type=jnp.float32) + b_spt_ref[...]
    proj_qry = jnp.dot(qry_ref[...], w_qry_ref[...],
                       preferred_element_type=jnp.float32) + b_qry_ref[...]

    # Per-instance attention + lane-dense assembly (static unroll over Bb;
    # all slices are static and 8-sublane aligned since S == Q == 8 here).
    for b in range(Bb):
        k_b = proj_spt[b * S:(b + 1) * S, :K]                     # (S, K)
        v_b = proj_spt[b * S:(b + 1) * S, K:]                     # (S, V)
        q_b = proj_qry[b * Q:(b + 1) * Q, :K]                     # (Q, K) pre-scaled
        fc_b = proj_qry[b * Q:(b + 1) * Q, K:]                    # (Q, Ck)
        spt_b = spt_all[b * S:(b + 1) * S, :]                     # (S, Ck)

        # Scores: (query / sqrt(K)) @ keys^T, contracting the key_size axis.
        scores = jax.lax.dot_general(
            q_b, k_b, dimension_numbers=(((1,), (1,)), ((), ())),
            preferred_element_type=jnp.float32)                   # (Q, S)

        # Exact softmax over the support axis (denominator is only (Q, 1)).
        m = jnp.max(scores, axis=1, keepdims=True)
        e = jnp.exp(scores - m)
        w = e / jnp.sum(e, axis=1, keepdims=True)                 # (Q, S)

        # Attention-weighted values for the query row.
        qv = jnp.dot(w, v_b, preferred_element_type=jnp.float32)  # (Q, V)

        # Flat (Q, (S+1)*(Ck+V)) row, built by lane-axis concatenation only:
        #   [ spt[0] | w[:,0]*values[0] | ... | spt[S-1] | w[:,S-1]*values[S-1]
        #     | fc(qry) | softmax@values ]
        pieces = []
        for s in range(S):
            pieces.append(jnp.broadcast_to(spt_b[s:s + 1, :], (Q, Ck)))  # (Q, Ck)
            pieces.append(w[:, s:s + 1] * v_b[s:s + 1, :])               # (Q, V)
        pieces.append(fc_b)
        pieces.append(qv)
        out_ref[b] = jnp.concatenate(pieces, axis=1)              # (Q, (S+1)*(Ck+V))


def qs_attention_block1_batched(spt_b, qry_b, params, *, bb_max=8):
    """Batched Pallas forward.

    spt_b: (B, S, Ck), qry_b: (B, Q, Cq) -> (B, Q, S+1, Ck+V).
    params = (wk, bk, wq, bq, wv, bv, wfc, bfc), weights transposed to (in, out).
    Each grid step processes Bb = min(B, bb_max) instances.
    """
    wk, bk, wq, bq, wv, bv, wfc, bfc = params
    Ck, K = wk.shape
    V = wv.shape[1]
    Cq = wq.shape[0]
    B, S, _ = spt_b.shape
    _, Q, _ = qry_b.shape

    if S == 0:
        # Empty-support path (pure JAX; matches torch:
        # cat([fc(qry), qry[:, :value_size]], 1).unsqueeze(1)).
        fc = jnp.einsum("bqc,ck->bqk", qry_b, wfc) + bfc
        return jnp.concatenate([fc, qry_b[:, :, :V]], axis=2)[:, :, None, :]

    Bb = min(B, bb_max)
    nb = -(-B // Bb)                 # cdiv(B, Bb) grid steps
    B_pad = nb * Bb
    if B_pad != B:
        pad = B_pad - B
        spt_b = jnp.concatenate(
            [spt_b, jnp.zeros((pad, S, Ck), spt_b.dtype)], axis=0)
        qry_b = jnp.concatenate(
            [qry_b, jnp.zeros((pad, Q, Cq), qry_b.dtype)], axis=0)

    # Tiling constraint: when the grid has >1 step the blocks' second-minor
    # dims (Bb*S, Bb*Q, Q) must be multiples of 8.
    assert nb == 1 or ((Bb * S) % 8 == 0 and (Bb * Q) % 8 == 0 and Q % 8 == 0)

    # Fuse projection weights; fold the 1/sqrt(key_size) score scale into the
    # query projection so the kernel has no scaling op at all.
    inv_sqrt_k = 1.0 / math.sqrt(K)
    w_spt = jnp.concatenate([wk, wv], axis=1)                     # (Ck, K+V)
    b_spt = jnp.concatenate([bk, bv])[None, :]                    # (1,  K+V)
    w_qry = jnp.concatenate([wq * inv_sqrt_k, wfc], axis=1)       # (Cq, K+Ck)
    b_qry = jnp.concatenate([bq * inv_sqrt_k, bfc])[None, :]      # (1,  K+Ck)

    # Free XLA reshapes (contiguous HBM) so the kernel sees 2-D blocks and can
    # run the projections as two matmuls per grid step.
    spt2 = spt_b.reshape(B_pad * S, Ck)
    qry2 = qry_b.reshape(B_pad * Q, Cq)

    OUT = (S + 1) * (Ck + V)
    kernel = functools.partial(_qs_attention_kernel,
                               Bb=Bb, S=S, Q=Q, Ck=Ck, K=K, V=V)

    def resident(arr):
        # Constant index_map -> the block stays in VMEM across all grid steps.
        return pl.BlockSpec(arr.shape, lambda i: (0,) * arr.ndim)

    out = pl.pallas_call(
        kernel,
        out_shape=jax.ShapeDtypeStruct((B_pad, Q, OUT), jnp.float32),
        grid=(nb,),
        in_specs=[
            pl.BlockSpec((Bb * S, Ck), lambda i: (i, 0)),
            pl.BlockSpec((Bb * Q, Cq), lambda i: (i, 0)),
            resident(w_spt), resident(b_spt),
            resident(w_qry), resident(b_qry),
        ],
        out_specs=pl.BlockSpec((Bb, Q, OUT), lambda i: (i, 0, 0)),
        compiler_params=pltpu.CompilerParams(
            dimension_semantics=("parallel",)),
    )(spt2, qry2, w_spt, b_spt, w_qry, b_qry)

    # Free reshape back to the module's logical layout; drop batch padding.
    return out.reshape(B_pad, Q, S + 1, Ck + V)[:B]


def qs_attention_block1(spt, qry, params):
    """Single-instance forward (matches QSAttentionBlock1.forward)."""
    wk, bk, wq, bq, wv, bv, wfc, bfc = params
    V = wv.shape[1]
    if spt.shape[0] == 0:
        # Matches torch: cat([fc(qry), qry[:, :value_size]], 1).unsqueeze(1)
        # (also assumes Cq >= V, exactly as the PyTorch module does).
        return jnp.concatenate([qry @ wfc + bfc, qry[:, :V]], axis=1)[:, None, :]
    return qs_attention_block1_batched(spt[None], qry[None], params)[0]


def qs_attention_block1_ref(spt, qry, params, key_size):
    """Pure-JAX reference mirroring the PyTorch forward (non-empty spt path)."""
    wk, bk, wq, bq, wv, bv, wfc, bfc = params
    Q = qry.shape[0]
    keys = spt @ wk + bk
    query = qry @ wq + bq
    values = spt @ wv + bv
    temp = query @ keys.T
    weights = jax.nn.softmax(temp / math.sqrt(key_size), axis=1)
    qry_values = weights @ values
    spt_values = values[None, :, :] * weights[:, :, None]
    qry_values = jnp.concatenate([qry @ wfc + bfc, qry_values], axis=1)
    x = jnp.concatenate(
        [jnp.broadcast_to(spt[None, :, :], (Q,) + spt.shape), spt_values], axis=2)
    x = jnp.concatenate([x, qry_values[:, None, :]], axis=1)
    return x


def _linear_params(key, in_features, out_features):
    """Deterministic nn.Linear-style init; weight returned as (in, out)."""
    kw, kb = jax.random.split(key)
    bound = 1.0 / math.sqrt(in_features)
    w = jax.random.uniform(kw, (in_features, out_features), jnp.float32, -bound, bound)
    b = jax.random.uniform(kb, (out_features,), jnp.float32, -bound, bound)
    return w, b


if __name__ == "__main__":
    # Module hyper-parameters (small, consistent with the forward pass).
    in_channels_key = 16    # Ck: feature dim of spt
    in_channels_query = 32  # Cq: feature dim of qry
    key_size = 32
    value_size = 16
    B, S, Q = 4, 8, 8       # instances / support rows / query rows

    root = jax.random.PRNGKey(0)
    k_spt, k_qry, k1, k2, k3, k4 = jax.random.split(root, 6)

    spt_b = jax.random.normal(k_spt, (B, S, in_channels_key), jnp.float32)
    qry_b = jax.random.normal(k_qry, (B, Q, in_channels_query), jnp.float32)

    wk, bk = _linear_params(k1, in_channels_key, key_size)             # linear_keys
    wq, bq = _linear_params(k2, in_channels_query, key_size)           # linear_query
    wv, bv = _linear_params(k3, in_channels_key, value_size)           # linear_values_spt
    wfc, bfc = _linear_params(k4, in_channels_query, in_channels_key)  # fc
    params = (wk, bk, wq, bq, wv, bv, wfc, bfc)

    # Batched path: one pallas_call, all B instances in a single grid step.
    out_b = jax.block_until_ready(qs_attention_block1_batched(spt_b, qry_b, params))
    assert out_b.shape == (B, Q, S + 1, in_channels_key + value_size), out_b.shape

    for b in range(B):
        ref = qs_attention_block1_ref(spt_b[b], qry_b[b], params, key_size)
        np.testing.assert_allclose(np.asarray(out_b[b]), np.asarray(ref),
                                   rtol=1e-4, atol=1e-4)

    # Multi-step grid path (Bb=2 -> grid=(2,)): exercises the tiled/parallel
    # batch axis (the configuration a v7x chip would use for large B).
    out_b2 = jax.block_until_ready(
        qs_attention_block1_batched(spt_b, qry_b, params, bb_max=2))
    np.testing.assert_allclose(np.asarray(out_b2), np.asarray(out_b),
                               rtol=1e-5, atol=1e-5)

    # Single-instance path (B=1 through the same kernel).
    out1 = jax.block_until_ready(qs_attention_block1(spt_b[0], qry_b[0], params))
    ref1 = qs_attention_block1_ref(spt_b[0], qry_b[0], params, key_size)
    np.testing.assert_allclose(np.asarray(out1), np.asarray(ref1),
                               rtol=1e-4, atol=1e-4)

    print("KERNEL_OK")
</pallas_src>

<mosaic_0001>
module attributes {stable_mosaic.version = 11 : i64} {
  func.func @_qs_attention_kernel(%arg0: i32, %arg1: memref<32x16xf32, #tpu.memory_space<vmem>>, %arg2: memref<32x32xf32, #tpu.memory_space<vmem>>, %arg3: memref<16x48xf32, #tpu.memory_space<vmem>>, %arg4: memref<1x48xf32, #tpu.memory_space<vmem>>, %arg5: memref<32x48xf32, #tpu.memory_space<vmem>>, %arg6: memref<1x48xf32, #tpu.memory_space<vmem>>, %arg7: memref<4x8x288xf32, #tpu.memory_space<vmem>>) attributes {dimension_semantics = [#tpu.dimension_semantics<parallel>], iteration_bounds = array<i64: 1>, scalar_prefetch = 0 : i64, scratch_operands = 0 : i64, tpu.core_type = #tpu.core_type<tc>, window_params = [{transform_indices = @transform_0, window_bounds = array<i64: 32, 16>}, {transform_indices = @transform_1, window_bounds = array<i64: 32, 32>}, {pipeline_mode = #tpu.pipeline_mode<synchronous>, transform_indices = @transform_2, window_bounds = array<i64: 16, 48>}, {pipeline_mode = #tpu.pipeline_mode<synchronous>, transform_indices = @transform_3, window_bounds = array<i64: 1, 48>}, {pipeline_mode = #tpu.pipeline_mode<synchronous>, transform_indices = @transform_4, window_bounds = array<i64: 32, 48>}, {pipeline_mode = #tpu.pipeline_mode<synchronous>, transform_indices = @transform_5, window_bounds = array<i64: 1, 48>}, {transform_indices = @transform_6, window_bounds = array<i64: 4, 8, 288>}]} {
    %c0 = arith.constant 0 : index
    %c0_0 = arith.constant 0 : index
    %0 = vector.load %arg1[%c0, %c0_0] : memref<32x16xf32, #tpu.memory_space<vmem>>, vector<32x16xf32>
    %c0_1 = arith.constant 0 : index
    %c0_2 = arith.constant 0 : index
    %1 = vector.load %arg3[%c0_1, %c0_2] : memref<16x48xf32, #tpu.memory_space<vmem>>, vector<16x48xf32>
    %cst = arith.constant dense<0.000000e+00> : vector<32x48xf32>
    %2 = tpu.matmul %0, %1, %cst {dimension_numbers = #tpu.dot_dimension_numbers<[1], [0], [0], [1], [0, 0, 1, 1], [], []>} : vector<32x16xf32>, vector<16x48xf32>, vector<32x48xf32> -> vector<32x48xf32>
    %c0_3 = arith.constant 0 : index
    %c0_4 = arith.constant 0 : index
    %3 = vector.load %arg4[%c0_3, %c0_4] : memref<1x48xf32, #tpu.memory_space<vmem>>, vector<1x48xf32>
    %4 = vector.broadcast %3 : vector<1x48xf32> to vector<32x48xf32>
    %5 = arith.addf %2, %4 : vector<32x48xf32>
    %c0_5 = arith.constant 0 : index
    %c0_6 = arith.constant 0 : index
    %6 = vector.load %arg2[%c0_5, %c0_6] : memref<32x32xf32, #tpu.memory_space<vmem>>, vector<32x32xf32>
    %c0_7 = arith.constant 0 : index
    %c0_8 = arith.constant 0 : index
    %7 = vector.load %arg5[%c0_7, %c0_8] : memref<32x48xf32, #tpu.memory_space<vmem>>, vector<32x48xf32>
    %cst_9 = arith.constant dense<0.000000e+00> : vector<32x48xf32>
    %8 = tpu.matmul %6, %7, %cst_9 {dimension_numbers = #tpu.dot_dimension_numbers<[1], [0], [0], [1], [0, 0, 1, 1], [], []>} : vector<32x32xf32>, vector<32x48xf32>, vector<32x48xf32> -> vector<32x48xf32>
    %c0_10 = arith.constant 0 : index
    %c0_11 = arith.constant 0 : index
    %9 = vector.load %arg6[%c0_10, %c0_11] : memref<1x48xf32, #tpu.memory_space<vmem>>, vector<1x48xf32>
    %10 = vector.broadcast %9 : vector<1x48xf32> to vector<32x48xf32>
    %11 = arith.addf %8, %10 : vector<32x48xf32>
    %12 = vector.extract_strided_slice %5 {offsets = [0, 0], sizes = [8, 32], strides = [1, 1]} : vector<32x48xf32> to vector<8x32xf32>
    %13 = vector.extract_strided_slice %5 {offsets = [0, 32], sizes = [8, 16], strides = [1, 1]} : vector<32x48xf32> to vector<8x16xf32>
    %14 = vector.extract_strided_slice %11 {offsets = [0, 0], sizes = [8, 32], strides = [1, 1]} : vector<32x48xf32> to vector<8x32xf32>
    %15 = vector.extract_strided_slice %11 {offsets = [0, 32], sizes = [8, 16], strides = [1, 1]} : vector<32x48xf32> to vector<8x16xf32>
    %16 = vector.extract_strided_slice %0 {offsets = [0, 0], sizes = [8, 16], strides = [1, 1]} : vector<32x16xf32> to vector<8x16xf32>
    %cst_12 = arith.constant dense<0.000000e+00> : vector<8x8xf32>
    %17 = tpu.matmul %14, %12, %cst_12 {dimension_numbers = #tpu.dot_dimension_numbers<[1], [1], [0], [0], [0, 0, 1, 0], [], []>} : vector<8x32xf32>, vector<8x32xf32>, vector<8x8xf32> -> vector<8x8xf32>
    %cst_13 = arith.constant dense<0xFF800000> : vector<8xf32>
    %18 = vector.multi_reduction <maximumf>, %17, %cst_13 [1] : vector<8x8xf32> to vector<8xf32>
    %19 = vector.shape_cast %18 : vector<8xf32> to vector<8x1xf32>
    %20 = vector.broadcast %19 : vector<8x1xf32> to vector<8x8xf32>
    %21 = arith.subf %17, %20 : vector<8x8xf32>
    %22 = math.exp %21 : vector<8x8xf32>
    %cst_14 = arith.constant dense<0.000000e+00> : vector<8xf32>
    %23 = vector.multi_reduction <add>, %22, %cst_14 [1] : vector<8x8xf32> to vector<8xf32>
    %24 = vector.shape_cast %23 : vector<8xf32> to vector<8x1xf32>
    %25 = vector.broadcast %24 : vector<8x1xf32> to vector<8x8xf32>
    %26 = arith.divf %22, %25 : vector<8x8xf32>
    %cst_15 = arith.constant dense<0.000000e+00> : vector<8x16xf32>
    %27 = tpu.matmul %26, %13, %cst_15 {dimension_numbers = #tpu.dot_dimension_numbers<[1], [0], [0], [1], [0, 0, 1, 1], [], []>} : vector<8x8xf32>, vector<8x16xf32>, vector<8x16xf32> -> vector<8x16xf32>
    %28 = vector.extract_strided_slice %16 {offsets = [0, 0], sizes = [1, 16], strides = [1, 1]} : vector<8x16xf32> to vector<1x16xf32>
    %29 = vector.shape_cast %28 : vector<1x16xf32> to vector<1x16xf32>
    %30 = vector.broadcast %29 : vector<1x16xf32> to vector<8x16xf32>
    %31 = vector.extract_strided_slice %26 {offsets = [0, 0], sizes = [8, 1], strides = [1, 1]} : vector<8x8xf32> to vector<8x1xf32>
    %32 = vector.extract_strided_slice %13 {offsets = [0, 0], sizes = [1, 16], strides = [1, 1]} : vector<8x16xf32> to vector<1x16xf32>
    %33 = vector.broadcast %31 : vector<8x1xf32> to vector<8x16xf32>
    %34 = vector.broadcast %32 : vector<1x16xf32> to vector<8x16xf32>
    %35 = arith.mulf %33, %34 : vector<8x16xf32>
    %36 = vector.extract_strided_slice %16 {offsets = [1, 0], sizes = [1, 16], strides = [1, 1]} : vector<8x16xf32> to vector<1x16xf32>
    %37 = vector.shape_cast %36 : vector<1x16xf32> to vector<1x16xf32>
    %38 = vector.broadcast %37 : vector<1x16xf32> to vector<8x16xf32>
    %39 = vector.extract_strided_slice %26 {offsets = [0, 1], sizes = [8, 1], strides = [1, 1]} : vector<8x8xf32> to vector<8x1xf32>
    %40 = vector.extract_strided_slice %13 {offsets = [1, 0], sizes = [1, 16], strides = [1, 1]} : vector<8x16xf32> to vector<1x16xf32>
    %41 = vector.broadcast %39 : vector<8x1xf32> to vector<8x16xf32>
    %42 = vector.broadcast %40 : vector<1x16xf32> to vector<8x16xf32>
    %43 = arith.mulf %41, %42 : vector<8x16xf32>
    %44 = vector.extract_strided_slice %16 {offsets = [2, 0], sizes = [1, 16], strides = [1, 1]} : vector<8x16xf32> to vector<1x16xf32>
    %45 = vector.shape_cast %44 : vector<1x16xf32> to vector<1x16xf32>
    %46 = vector.broadcast %45 : vector<1x16xf32> to vector<8x16xf32>
    %47 = vector.extract_strided_slice %26 {offsets = [0, 2], sizes = [8, 1], strides = [1, 1]} : vector<8x8xf32> to vector<8x1xf32>
    %48 = vector.extract_strided_slice %13 {offsets = [2, 0], sizes = [1, 16], strides = [1, 1]} : vector<8x16xf32> to vector<1x16xf32>
    %49 = vector.broadcast %47 : vector<8x1xf32> to vector<8x16xf32>
    %50 = vector.broadcast %48 : vector<1x16xf32> to vector<8x16xf32>
    %51 = arith.mulf %49, %50 : vector<8x16xf32>
    %52 = vector.extract_strided_slice %16 {offsets = [3, 0], sizes = [1, 16], strides = [1, 1]} : vector<8x16xf32> to vector<1x16xf32>
    %53 = vector.shape_cast %52 : vector<1x16xf32> to vector<1x16xf32>
    %54 = vector.broadcast %53 : vector<1x16xf32> to vector<8x16xf32>
    %55 = vector.extract_strided_slice %26 {offsets = [0, 3], sizes = [8, 1], strides = [1, 1]} : vector<8x8xf32> to vector<8x1xf32>
    %56 = vector.extract_strided_slice %13 {offsets = [3, 0], sizes = [1, 16], strides = [1, 1]} : vector<8x16xf32> to vector<1x16xf32>
    %57 = vector.broadcast %55 : vector<8x1xf32> to vector<8x16xf32>
    %58 = vector.broadcast %56 : vector<1x16xf32> to vector<8x16xf32>
    %59 = arith.mulf %57, %58 : vector<8x16xf32>
    %60 = vector.extract_strided_slice %16 {offsets = [4, 0], sizes = [1, 16], strides = [1, 1]} : vector<8x16xf32> to vector<1x16xf32>
    %61 = vector.shape_cast %60 : vector<1x16xf32> to vector<1x16xf32>
    %62 = vector.broadcast %61 : vector<1x16xf32> to vector<8x16xf32>
    %63 = vector.extract_strided_slice %26 {offsets = [0, 4], sizes = [8, 1], strides = [1, 1]} : vector<8x8xf32> to vector<8x1xf32>
    %64 = vector.extract_strided_slice %13 {offsets = [4, 0], sizes = [1, 16], strides = [1, 1]} : vector<8x16xf32> to vector<1x16xf32>
    %65 = vector.broadcast %63 : vector<8x1xf32> to vector<8x16xf32>
    %66 = vector.broadcast %64 : vector<1x16xf32> to vector<8x16xf32>
    %67 = arith.mulf %65, %66 : vector<8x16xf32>
    %68 = vector.extract_strided_slice %16 {offsets = [5, 0], sizes = [1, 16], strides = [1, 1]} : vector<8x16xf32> to vector<1x16xf32>
    %69 = vector.shape_cast %68 : vector<1x16xf32> to vector<1x16xf32>
    %70 = vector.broadcast %69 : vector<1x16xf32> to vector<8x16xf32>
    %71 = vector.extract_strided_slice %26 {offsets = [0, 5], sizes = [8, 1], strides = [1, 1]} : vector<8x8xf32> to vector<8x1xf32>
    %72 = vector.extract_strided_slice %13 {offsets = [5, 0], sizes = [1, 16], strides = [1, 1]} : vector<8x16xf32> to vector<1x16xf32>
    %73 = vector.broadcast %71 : vector<8x1xf32> to vector<8x16xf32>
    %74 = vector.broadcast %72 : vector<1x16xf32> to vector<8x16xf32>
    %75 = arith.mulf %73, %74 : vector<8x16xf32>
    %76 = vector.extract_strided_slice %16 {offsets = [6, 0], sizes = [1, 16], strides = [1, 1]} : vector<8x16xf32> to vector<1x16xf32>
    %77 = vector.shape_cast %76 : vector<1x16xf32> to vector<1x16xf32>
    %78 = vector.broadcast %77 : vector<1x16xf32> to vector<8x16xf32>
    %79 = vector.extract_strided_slice %26 {offsets = [0, 6], sizes = [8, 1], strides = [1, 1]} : vector<8x8xf32> to vector<8x1xf32>
    %80 = vector.extract_strided_slice %13 {offsets = [6, 0], sizes = [1, 16], strides = [1, 1]} : vector<8x16xf32> to vector<1x16xf32>
    %81 = vector.broadcast %79 : vector<8x1xf32> to vector<8x16xf32>
    %82 = vector.broadcast %80 : vector<1x16xf32> to vector<8x16xf32>
    %83 = arith.mulf %81, %82 : vector<8x16xf32>
    %84 = vector.extract_strided_slice %16 {offsets = [7, 0], sizes = [1, 16], strides = [1, 1]} : vector<8x16xf32> to vector<1x16xf32>
    %85 = vector.shape_cast %84 : vector<1x16xf32> to vector<1x16xf32>
    %86 = vector.broadcast %85 : vector<1x16xf32> to vector<8x16xf32>
    %87 = vector.extract_strided_slice %26 {offsets = [0, 7], sizes = [8, 1], strides = [1, 1]} : vector<8x8xf32> to vector<8x1xf32>
    %88 = vector.extract_strided_slice %13 {offsets = [7, 0], sizes = [1, 16], strides = [1, 1]} : vector<8x16xf32> to vector<1x16xf32>
    %89 = vector.broadcast %87 : vector<8x1xf32> to vector<8x16xf32>
    %90 = vector.broadcast %88 : vector<1x16xf32> to vector<8x16xf32>
    %91 = arith.mulf %89, %90 : vector<8x16xf32>
    %92 = tpu.concatenate %30, %35, %38, %43, %46, %51, %54, %59, %62, %67, %70, %75, %78, %83, %86, %91 in 1 : vector<8x16xf32>, vector<8x16xf32>, vector<8x16xf32>, vector<8x16xf32>, vector<8x16xf32>, vector<8x16xf32>, vector<8x16xf32>, vector<8x16xf32>, vector<8x16xf32>, vector<8x16xf32>, vector<8x16xf32>, vector<8x16xf32>, vector<8x16xf32>, vector<8x16xf32>, vector<8x16xf32>, vector<8x16xf32> -> vector<8x256xf32>
    %93 = tpu.concatenate %15, %27 in 1 : vector<8x16xf32>, vector<8x16xf32> -> vector<8x32xf32>
    %94 = tpu.concatenate %92, %93 in 1 : vector<8x256xf32>, vector<8x32xf32> -> vector<8x288xf32>
    %c0_16 = arith.constant 0 : index
    %c0_17 = arith.constant 0 : index
    %c0_18 = arith.constant 0 : index
    %95 = vector.load %arg7[%c0_16, %c0_17, %c0_18] : memref<4x8x288xf32, #tpu.memory_space<vmem>>, vector<1x8x288xf32>
    %96 = vector.shape_cast %95 : vector<1x8x288xf32> to vector<8x288xf32>
    %97 = vector.shape_cast %94 : vector<8x288xf32> to vector<1x8x288xf32>
    tpu.vector_store %arg7[%c0_16, %c0_17, %c0_18], %97 {strides = array<i32>} : memref<4x8x288xf32, #tpu.memory_space<vmem>>, vector<1x8x288xf32>,
    %98 = vector.extract_strided_slice %5 {offsets = [8, 0], sizes = [8, 32], strides = [1, 1]} : vector<32x48xf32> to vector<8x32xf32>
    %99 = vector.extract_strided_slice %5 {offsets = [8, 32], sizes = [8, 16], strides = [1, 1]} : vector<32x48xf32> to vector<8x16xf32>
    %100 = vector.extract_strided_slice %11 {offsets = [8, 0], sizes = [8, 32], strides = [1, 1]} : vector<32x48xf32> to vector<8x32xf32>
    %101 = vector.extract_strided_slice %11 {offsets = [8, 32], sizes = [8, 16], strides = [1, 1]} : vector<32x48xf32> to vector<8x16xf32>
    %102 = vector.extract_strided_slice %0 {offsets = [8, 0], sizes = [8, 16], strides = [1, 1]} : vector<32x16xf32> to vector<8x16xf32>
    %cst_19 = arith.constant dense<0.000000e+00> : vector<8x8xf32>
    %103 = tpu.matmul %100, %98, %cst_19 {dimension_numbers = #tpu.dot_dimension_numbers<[1], [1], [0], [0], [0, 0, 1, 0], [], []>} : vector<8x32xf32>, vector<8x32xf32>, vector<8x8xf32> -> vector<8x8xf32>
    %cst_20 = arith.constant dense<0xFF800000> : vector<8xf32>
    %104 = vector.multi_reduction <maximumf>, %103, %cst_20 [1] : vector<8x8xf32> to vector<8xf32>
    %105 = vector.shape_cast %104 : vector<8xf32> to vector<8x1xf32>
    %106 = vector.broadcast %105 : vector<8x1xf32> to vector<8x8xf32>
    %107 = arith.subf %103, %106 : vector<8x8xf32>
    %108 = math.exp %107 : vector<8x8xf32>
    %cst_21 = arith.constant dense<0.000000e+00> : vector<8xf32>
    %109 = vector.multi_reduction <add>, %108, %cst_21 [1] : vector<8x8xf32> to vector<8xf32>
    %110 = vector.shape_cast %109 : vector<8xf32> to vector<8x1xf32>
    %111 = vector.broadcast %110 : vector<8x1xf32> to vector<8x8xf32>
    %112 = arith.divf %108, %111 : vector<8x8xf32>
    %cst_22 = arith.constant dense<0.000000e+00> : vector<8x16xf32>
    %113 = tpu.matmul %112, %99, %cst_22 {dimension_numbers = #tpu.dot_dimension_numbers<[1], [0], [0], [1], [0, 0, 1, 1], [], []>} : vector<8x8xf32>, vector<8x16xf32>, vector<8x16xf32> -> vector<8x16xf32>
    %114 = vector.extract_strided_slice %102 {offsets = [0, 0], sizes = [1, 16], strides = [1, 1]} : vector<8x16xf32> to vector<1x16xf32>
    %115 = vector.shape_cast %114 : vector<1x16xf32> to vector<1x16xf32>
    %116 = vector.broadcast %115 : vector<1x16xf32> to vector<8x16xf32>
    %117 = vector.extract_strided_slice %112 {offsets = [0, 0], sizes = [8, 1], strides = [1, 1]} : vector<8x8xf32> to vector<8x1xf32>
    %118 = vector.extract_strided_slice %99 {offsets = [0, 0], sizes = [1, 16], strides = [1, 1]} : vector<8x16xf32> to vector<1x16xf32>
    %119 = vector.broadcast %117 : vector<8x1xf32> to vector<8x16xf32>
    %120 = vector.broadcast %118 : vector<1x16xf32> to vector<8x16xf32>
    %121 = arith.mulf %119, %120 : vector<8x16xf32>
    %122 = vector.extract_strided_slice %102 {offsets = [1, 0], sizes = [1, 16], strides = [1, 1]} : vector<8x16xf32> to vector<1x16xf32>
    %123 = vector.shape_cast %122 : vector<1x16xf32> to vector<1x16xf32>
    %124 = vector.broadcast %123 : vector<1x16xf32> to vector<8x16xf32>
    %125 = vector.extract_strided_slice %112 {offsets = [0, 1], sizes = [8, 1], strides = [1, 1]} : vector<8x8xf32> to vector<8x1xf32>
    %126 = vector.extract_strided_slice %99 {offsets = [1, 0], sizes = [1, 16], strides = [1, 1]} : vector<8x16xf32> to vector<1x16xf32>
    %127 = vector.broadcast %125 : vector<8x1xf32> to vector<8x16xf32>
    %128 = vector.broadcast %126 : vector<1x16xf32> to vector<8x16xf32>
    %129 = arith.mulf %127, %128 : vector<8x16xf32>
    %130 = vector.extract_strided_slice %102 {offsets = [2, 0], sizes = [1, 16], strides = [1, 1]} : vector<8x16xf32> to vector<1x16xf32>
    %131 = vector.shape_cast %130 : vector<1x16xf32> to vector<1x16xf32>
    %132 = vector.broadcast %131 : vector<1x16xf32> to vector<8x16xf32>
    %133 = vector.extract_strided_slice %112 {offsets = [0, 2], sizes = [8, 1], strides = [1, 1]} : vector<8x8xf32> to vector<8x1xf32>
    %134 = vector.extract_strided_slice %99 {offsets = [2, 0], sizes = [1, 16], strides = [1, 1]} : vector<8x16xf32> to vector<1x16xf32>
    %135 = vector.broadcast %133 : vector<8x1xf32> to vector<8x16xf32>
    %136 = vector.broadcast %134 : vector<1x16xf32> to vector<8x16xf32>
    %137 = arith.mulf %135, %136 : vector<8x16xf32>
    %138 = vector.extract_strided_slice %102 {offsets = [3, 0], sizes = [1, 16], strides = [1, 1]} : vector<8x16xf32> to vector<1x16xf32>
    %139 = vector.shape_cast %138 : vector<1x16xf32> to vector<1x16xf32>
    %140 = vector.broadcast %139 : vector<1x16xf32> to vector<8x16xf32>
    %141 = vector.extract_strided_slice %112 {offsets = [0, 3], sizes = [8, 1], strides = [1, 1]} : vector<8x8xf32> to vector<8x1xf32>
    %142 = vector.extract_strided_slice %99 {offsets = [3, 0], sizes = [1, 16], strides = [1, 1]} : vector<8x16xf32> to vector<1x16xf32>
    %143 = vector.broadcast %141 : vector<8x1xf32> to vector<8x16xf32>
    %144 = vector.broadcast %142 : vector<1x16xf32> to vector<8x16xf32>
    %145 = arith.mulf %143, %144 : vector<8x16xf32>
    %146 = vector.extract_strided_slice %102 {offsets = [4, 0], sizes = [1, 16], strides = [1, 1]} : vector<8x16xf32> to vector<1x16xf32>
    %147 = vector.shape_cast %146 : vector<1x16xf32> to vector<1x16xf32>
    %148 = vector.broadcast %147 : vector<1x16xf32> to vector<8x16xf32>
    %149 = vector.extract_strided_slice %112 {offsets = [0, 4], sizes = [8, 1], strides = [1, 1]} : vector<8x8xf32> to vector<8x1xf32>
    %150 = vector.extract_strided_slice %99 {offsets = [4, 0], sizes = [1, 16], strides = [1, 1]} : vector<8x16xf32> to vector<1x16xf32>
    %151 = vector.broadcast %149 : vector<8x1xf32> to vector<8x16xf32>
    %152 = vector.broadcast %150 : vector<1x16xf32> to vector<8x16xf32>
    %153 = arith.mulf %151, %152 : vector<8x16xf32>
    %154 = vector.extract_strided_slice %102 {offsets = [5, 0], sizes = [1, 16], strides = [1, 1]} : vector<8x16xf32> to vector<1x16xf32>
    %155 = vector.shape_cast %154 : vector<1x16xf32> to vector<1x16xf32>
    %156 = vector.broadcast %155 : vector<1x16xf32> to vector<8x16xf32>
    %157 = vector.extract_strided_slice %112 {offsets = [0, 5], sizes = [8, 1], strides = [1, 1]} : vector<8x8xf32> to vector<8x1xf32>
    %158 = vector.extract_strided_slice %99 {offsets = [5, 0], sizes = [1, 16], strides = [1, 1]} : vector<8x16xf32> to vector<1x16xf32>
    %159 = vector.broadcast %157 : vector<8x1xf32> to vector<8x16xf32>
    %160 = vector.broadcast %158 : vector<1x16xf32> to vector<8x16xf32>
    %161 = arith.mulf %159, %160 : vector<8x16xf32>
    %162 = vector.extract_strided_slice %102 {offsets = [6, 0], sizes = [1, 16], strides = [1, 1]} : vector<8x16xf32> to vector<1x16xf32>
    %163 = vector.shape_cast %162 : vector<1x16xf32> to vector<1x16xf32>
    %164 = vector.broadcast %163 : vector<1x16xf32> to vector<8x16xf32>
    %165 = vector.extract_strided_slice %112 {offsets = [0, 6], sizes = [8, 1], strides = [1, 1]} : vector<8x8xf32> to vector<8x1xf32>
    %166 = vector.extract_strided_slice %99 {offsets = [6, 0], sizes = [1, 16], strides = [1, 1]} : vector<8x16xf32> to vector<1x16xf32>
    %167 = vector.broadcast %165 : vector<8x1xf32> to vector<8x16xf32>
    %168 = vector.broadcast %166 : vector<1x16xf32> to vector<8x16xf32>
    %169 = arith.mulf %167, %168 : vector<8x16xf32>
    %170 = vector.extract_strided_slice %102 {offsets = [7, 0], sizes = [1, 16], strides = [1, 1]} : vector<8x16xf32> to vector<1x16xf32>
    %171 = vector.shape_cast %170 : vector<1x16xf32> to vector<1x16xf32>
    %172 = vector.broadcast %171 : vector<1x16xf32> to vector<8x16xf32>
    %173 = vector.extract_strided_slice %112 {offsets = [0, 7], sizes = [8, 1], strides = [1, 1]} : vector<8x8xf32> to vector<8x1xf32>
    %174 = vector.extract_strided_slice %99 {offsets = [7, 0], sizes = [1, 16], strides = [1, 1]} : vector<8x16xf32> to vector<1x16xf32>
    %175 = vector.broadcast %173 : vector<8x1xf32> to vector<8x16xf32>
    %176 = vector.broadcast %174 : vector<1x16xf32> to vector<8x16xf32>
    %177 = arith.mulf %175, %176 : vector<8x16xf32>
    %178 = tpu.concatenate %116, %121, %124, %129, %132, %137, %140, %145, %148, %153, %156, %161, %164, %169, %172, %177 in 1 : vector<8x16xf32>, vector<8x16xf32>, vector<8x16xf32>, vector<8x16xf32>, vector<8x16xf32>, vector<8x16xf32>, vector<8x16xf32>, vector<8x16xf32>, vector<8x16xf32>, vector<8x16xf32>, vector<8x16xf32>, vector<8x16xf32>, vector<8x16xf32>, vector<8x16xf32>, vector<8x16xf32>, vector<8x16xf32> -> vector<8x256xf32>
    %179 = tpu.concatenate %101, %113 in 1 : vector<8x16xf32>, vector<8x16xf32> -> vector<8x32xf32>
    %180 = tpu.concatenate %178, %179 in 1 : vector<8x256xf32>, vector<8x32xf32> -> vector<8x288xf32>
    %c1 = arith.constant 1 : index
    %c0_23 = arith.constant 0 : index
    %c0_24 = arith.constant 0 : index
    %181 = vector.load %arg7[%c1, %c0_23, %c0_24] : memref<4x8x288xf32, #tpu.memory_space<vmem>>, vector<1x8x288xf32>
    %182 = vector.shape_cast %181 : vector<1x8x288xf32> to vector<8x288xf32>
    %183 = vector.shape_cast %180 : vector<8x288xf32> to vector<1x8x288xf32>
    tpu.vector_store %arg7[%c1, %c0_23, %c0_24], %183 {strides = array<i32>} : memref<4x8x288xf32, #tpu.memory_space<vmem>>, vector<1x8x288xf32>,
    %184 = vector.extract_strided_slice %5 {offsets = [16, 0], sizes = [8, 32], strides = [1, 1]} : vector<32x48xf32> to vector<8x32xf32>
    %185 = vector.extract_strided_slice %5 {offsets = [16, 32], sizes = [8, 16], strides = [1, 1]} : vector<32x48xf32> to vector<8x16xf32>
    %186 = vector.extract_strided_slice %11 {offsets = [16, 0], sizes = [8, 32], strides = [1, 1]} : vector<32x48xf32> to vector<8x32xf32>
    %187 = vector.extract_strided_slice %11 {offsets = [16, 32], sizes = [8, 16], strides = [1, 1]} : vector<32x48xf32> to vector<8x16xf32>
    %188 = vector.extract_strided_slice %0 {offsets = [16, 0], sizes = [8, 16], strides = [1, 1]} : vector<32x16xf32> to vector<8x16xf32>
    %cst_25 = arith.constant dense<0.000000e+00> : vector<8x8xf32>
    %189 = tpu.matmul %186, %184, %cst_25 {dimension_numbers = #tpu.dot_dimension_numbers<[1], [1], [0], [0], [0, 0, 1, 0], [], []>} : vector<8x32xf32>, vector<8x32xf32>, vector<8x8xf32> -> vector<8x8xf32>
    %cst_26 = arith.constant dense<0xFF800000> : vector<8xf32>
    %190 = vector.multi_reduction <maximumf>, %189, %cst_26 [1] : vector<8x8xf32> to vector<8xf32>
    %191 = vector.shape_cast %190 : vector<8xf32> to vector<8x1xf32>
    %192 = vector.broadcast %191 : vector<8x1xf32> to vector<8x8xf32>
    %193 = arith.subf %189, %192 : vector<8x8xf32>
    %194 = math.exp %193 : vector<8x8xf32>
    %cst_27 = arith.constant dense<0.000000e+00> : vector<8xf32>
    %195 = vector.multi_reduction <add>, %194, %cst_27 [1] : vector<8x8xf32> to vector<8xf32>
    %196 = vector.shape_cast %195 : vector<8xf32> to vector<8x1xf32>
    %197 = vector.broadcast %196 : vector<8x1xf32> to vector<8x8xf32>
    %198 = arith.divf %194, %197 : vector<8x8xf32>
    %cst_28 = arith.constant dense<0.000000e+00> : vector<8x16xf32>
    %199 = tpu.matmul %198, %185, %cst_28 {dimension_numbers = #tpu.dot_dimension_numbers<[1], [0], [0], [1], [0, 0, 1, 1], [], []>} : vector<8x8xf32>, vector<8x16xf32>, vector<8x16xf32> -> vector<8x16xf32>
    %200 = vector.extract_strided_slice %188 {offsets = [0, 0], sizes = [1, 16], strides = [1, 1]} : vector<8x16xf32> to vector<1x16xf32>
    %201 = vector.shape_cast %200 : vector<1x16xf32> to vector<1x16xf32>
    %202 = vector.broadcast %201 : vector<1x16xf32> to vector<8x16xf32>
    %203 = vector.extract_strided_slice %198 {offsets = [0, 0], sizes = [8, 1], strides = [1, 1]} : vector<8x8xf32> to vector<8x1xf32>
    %204 = vector.extract_strided_slice %185 {offsets = [0, 0], sizes = [1, 16], strides = [1, 1]} : vector<8x16xf32> to vector<1x16xf32>
    %205 = vector.broadcast %203 : vector<8x1xf32> to vector<8x16xf32>
    %206 = vector.broadcast %204 : vector<1x16xf32> to vector<8x16xf32>
    %207 = arith.mulf %205, %206 : vector<8x16xf32>
    %208 = vector.extract_strided_slice %188 {offsets = [1, 0], sizes = [1, 16], strides = [1, 1]} : vector<8x16xf32> to vector<1x16xf32>
    %209 = vector.shape_cast %208 : vector<1x16xf32> to vector<1x16xf32>
    %210 = vector.broadcast %209 : vector<1x16xf32> to vector<8x16xf32>
    %211 = vector.extract_strided_slice %198 {offsets = [0, 1], sizes = [8, 1], strides = [1, 1]} : vector<8x8xf32> to vector<8x1xf32>
    %212 = vector.extract_strided_slice %185 {offsets = [1, 0], sizes = [1, 16], strides = [1, 1]} : vector<8x16xf32> to vector<1x16xf32>
    %213 = vector.broadcast %211 : vector<8x1xf32> to vector<8x16xf32>
    %214 = vector.broadcast %212 : vector<1x16xf32> to vector<8x16xf32>
    %215 = arith.mulf %213, %214 : vector<8x16xf32>
    %216 = vector.extract_strided_slice %188 {offsets = [2, 0], sizes = [1, 16], strides = [1, 1]} : vector<8x16xf32> to vector<1x16xf32>
    %217 = vector.shape_cast %216 : vector<1x16xf32> to vector<1x16xf32>
    %218 = vector.broadcast %217 : vector<1x16xf32> to vector<8x16xf32>
    %219 = vector.extract_strided_slice %198 {offsets = [0, 2], sizes = [8, 1], strides = [1, 1]} : vector<8x8xf32> to vector<8x1xf32>
    %220 = vector.extract_strided_slice %185 {offsets = [2, 0], sizes = [1, 16], strides = [1, 1]} : vector<8x16xf32> to vector<1x16xf32>
    %221 = vector.broadcast %219 : vector<8x1xf32> to vector<8x16xf32>
    %222 = vector.broadcast %220 : vector<1x16xf32> to vector<8x16xf32>
    %223 = arith.mulf %221, %222 : vector<8x16xf32>
    %224 = vector.extract_strided_slice %188 {offsets = [3, 0], sizes = [1, 16], strides = [1, 1]} : vector<8x16xf32> to vector<1x16xf32>
    %225 = vector.shape_cast %224 : vector<1x16xf32> to vector<1x16xf32>
    %226 = vector.broadcast %225 : vector<1x16xf32> to vector<8x16xf32>
    %227 = vector.extract_strided_slice %198 {offsets = [0, 3], sizes = [8, 1], strides = [1, 1]} : vector<8x8xf32> to vector<8x1xf32>
    %228 = vector.extract_strided_slice %185 {offsets = [3, 0], sizes = [1, 16], strides = [1, 1]} : vector<8x16xf32> to vector<1x16xf32>
    %229 = vector.broadcast %227 : vector<8x1xf32> to vector<8x16xf32>
    %230 = vector.broadcast %228 : vector<1x16xf32> to vector<8x16xf32>
    %231 = arith.mulf %229, %230 : vector<8x16xf32>
    %232 = vector.extract_strided_slice %188 {offsets = [4, 0], sizes = [1, 16], strides = [1, 1]} : vector<8x16xf32> to vector<1x16xf32>
    %233 = vector.shape_cast %232 : vector<1x16xf32> to vector<1x16xf32>
    %234 = vector.broadcast %233 : vector<1x16xf32> to vector<8x16xf32>
    %235 = vector.extract_strided_slice %198 {offsets = [0, 4], sizes = [8, 1], strides = [1, 1]} : vector<8x8xf32> to vector<8x1xf32>
    %236 = vector.extract_strided_slice %185 {offsets = [4, 0], sizes = [1, 16], strides = [1, 1]} : vector<8x16xf32> to vector<1x16xf32>
    %237 = vector.broadcast %235 : vector<8x1xf32> to vector<8x16xf32>
    %238 = vector.broadcast %236 : vector<1x16xf32> to vector<8x16xf32>
    %239 = arith.mulf %237, %238 : vector<8x16xf32>
    %240 = vector.extract_strided_slice %188 {offsets = [5, 0], sizes = [1, 16], strides = [1, 1]} : vector<8x16xf32> to vector<1x16xf32>
    %241 = vector.shape_cast %240 : vector<1x16xf32> to vector<1x16xf32>
    %242 = vector.broadcast %241 : vector<1x16xf32> to vector<8x16xf32>
    %243 = vector.extract_strided_slice %198 {offsets = [0, 5], sizes = [8, 1], strides = [1, 1]} : vector<8x8xf32> to vector<8x1xf32>
    %244 = vector.extract_strided_slice %185 {offsets = [5, 0], sizes = [1, 16], strides = [1, 1]} : vector<8x16xf32> to vector<1x16xf32>
    %245 = vector.broadcast %243 : vector<8x1xf32> to vector<8x16xf32>
    %246 = vector.broadcast %244 : vector<1x16xf32> to vector<8x16xf32>
    %247 = arith.mulf %245, %246 : vector<8x16xf32>
    %248 = vector.extract_strided_slice %188 {offsets = [6, 0], sizes = [1, 16], strides = [1, 1]} : vector<8x16xf32> to vector<1x16xf32>
    %249 = vector.shape_cast %248 : vector<1x16xf32> to vector<1x16xf32>
    %250 = vector.broadcast %249 : vector<1x16xf32> to vector<8x16xf32>
    %251 = vector.extract_strided_slice %198 {offsets = [0, 6], sizes = [8, 1], strides = [1, 1]} : vector<8x8xf32> to vector<8x1xf32>
    %252 = vector.extract_strided_slice %185 {offsets = [6, 0], sizes = [1, 16], strides = [1, 1]} : vector<8x16xf32> to vector<1x16xf32>
    %253 = vector.broadcast %251 : vector<8x1xf32> to vector<8x16xf32>
    %254 = vector.broadcast %252 : vector<1x16xf32> to vector<8x16xf32>
    %255 = arith.mulf %253, %254 : vector<8x16xf32>
    %256 = vector.extract_strided_slice %188 {offsets = [7, 0], sizes = [1, 16], strides = [1, 1]} : vector<8x16xf32> to vector<1x16xf32>
    %257 = vector.shape_cast %256 : vector<1x16xf32> to vector<1x16xf32>
    %258 = vector.broadcast %257 : vector<1x16xf32> to vector<8x16xf32>
    %259 = vector.extract_strided_slice %198 {offsets = [0, 7], sizes = [8, 1], strides = [1, 1]} : vector<8x8xf32> to vector<8x1xf32>
    %260 = vector.extract_strided_slice %185 {offsets = [7, 0], sizes = [1, 16], strides = [1, 1]} : vector<8x16xf32> to vector<1x16xf32>
    %261 = vector.broadcast %259 : vector<8x1xf32> to vector<8x16xf32>
    %262 = vector.broadcast %260 : vector<1x16xf32> to vector<8x16xf32>
    %263 = arith.mulf %261, %262 : vector<8x16xf32>
    %264 = tpu.concatenate %202, %207, %210, %215, %218, %223, %226, %231, %234, %239, %242, %247, %250, %255, %258, %263 in 1 : vector<8x16xf32>, vector<8x16xf32>, vector<8x16xf32>, vector<8x16xf32>, vector<8x16xf32>, vector<8x16xf32>, vector<8x16xf32>, vector<8x16xf32>, vector<8x16xf32>, vector<8x16xf32>, vector<8x16xf32>, vector<8x16xf32>, vector<8x16xf32>, vector<8x16xf32>, vector<8x16xf32>, vector<8x16xf32> -> vector<8x256xf32>
    %265 = tpu.concatenate %187, %199 in 1 : vector<8x16xf32>, vector<8x16xf32> -> vector<8x32xf32>
    %266 = tpu.concatenate %264, %265 in 1 : vector<8x256xf32>, vector<8x32xf32> -> vector<8x288xf32>
    %c2 = arith.constant 2 : index
    %c0_29 = arith.constant 0 : index
    %c0_30 = arith.constant 0 : index
    %267 = vector.load %arg7[%c2, %c0_29, %c0_30] : memref<4x8x288xf32, #tpu.memory_space<vmem>>, vector<1x8x288xf32>
    %268 = vector.shape_cast %267 : vector<1x8x288xf32> to vector<8x288xf32>
    %269 = vector.shape_cast %266 : vector<8x288xf32> to vector<1x8x288xf32>
    tpu.vector_store %arg7[%c2, %c0_29, %c0_30], %269 {strides = array<i32>} : memref<4x8x288xf32, #tpu.memory_space<vmem>>, vector<1x8x288xf32>,
    %270 = vector.extract_strided_slice %5 {offsets = [24, 0], sizes = [8, 32], strides = [1, 1]} : vector<32x48xf32> to vector<8x32xf32>
    %271 = vector.extract_strided_slice %5 {offsets = [24, 32], sizes = [8, 16], strides = [1, 1]} : vector<32x48xf32> to vector<8x16xf32>
    %272 = vector.extract_strided_slice %11 {offsets = [24, 0], sizes = [8, 32], strides = [1, 1]} : vector<32x48xf32> to vector<8x32xf32>
    %273 = vector.extract_strided_slice %11 {offsets = [24, 32], sizes = [8, 16], strides = [1, 1]} : vector<32x48xf32> to vector<8x16xf32>
    %274 = vector.extract_strided_slice %0 {offsets = [24, 0], sizes = [8, 16], strides = [1, 1]} : vector<32x16xf32> to vector<8x16xf32>
    %cst_31 = arith.constant dense<0.000000e+00> : vector<8x8xf32>
    %275 = tpu.matmul %272, %270, %cst_31 {dimension_numbers = #tpu.dot_dimension_numbers<[1], [1], [0], [0], [0, 0, 1, 0], [], []>} : vector<8x32xf32>, vector<8x32xf32>, vector<8x8xf32> -> vector<8x8xf32>
    %cst_32 = arith.constant dense<0xFF800000> : vector<8xf32>
    %276 = vector.multi_reduction <maximumf>, %275, %cst_32 [1] : vector<8x8xf32> to vector<8xf32>
    %277 = vector.shape_cast %276 : vector<8xf32> to vector<8x1xf32>
    %278 = vector.broadcast %277 : vector<8x1xf32> to vector<8x8xf32>
    %279 = arith.subf %275, %278 : vector<8x8xf32>
    %280 = math.exp %279 : vector<8x8xf32>
    %cst_33 = arith.constant dense<0.000000e+00> : vector<8xf32>
    %281 = vector.multi_reduction <add>, %280, %cst_33 [1] : vector<8x8xf32> to vector<8xf32>
    %282 = vector.shape_cast %281 : vector<8xf32> to vector<8x1xf32>
    %283 = vector.broadcast %282 : vector<8x1xf32> to vector<8x8xf32>
    %284 = arith.divf %280, %283 : vector<8x8xf32>
    %cst_34 = arith.constant dense<0.000000e+00> : vector<8x16xf32>
    %285 = tpu.matmul %284, %271, %cst_34 {dimension_numbers = #tpu.dot_dimension_numbers<[1], [0], [0], [1], [0, 0, 1, 1], [], []>} : vector<8x8xf32>, vector<8x16xf32>, vector<8x16xf32> -> vector<8x16xf32>
    %286 = vector.extract_strided_slice %274 {offsets = [0, 0], sizes = [1, 16], strides = [1, 1]} : vector<8x16xf32> to vector<1x16xf32>
    %287 = vector.shape_cast %286 : vector<1x16xf32> to vector<1x16xf32>
    %288 = vector.broadcast %287 : vector<1x16xf32> to vector<8x16xf32>
    %289 = vector.extract_strided_slice %284 {offsets = [0, 0], sizes = [8, 1], strides = [1, 1]} : vector<8x8xf32> to vector<8x1xf32>
    %290 = vector.extract_strided_slice %271 {offsets = [0, 0], sizes = [1, 16], strides = [1, 1]} : vector<8x16xf32> to vector<1x16xf32>
    %291 = vector.broadcast %289 : vector<8x1xf32> to vector<8x16xf32>
    %292 = vector.broadcast %290 : vector<1x16xf32> to vector<8x16xf32>
    %293 = arith.mulf %291, %292 : vector<8x16xf32>
    %294 = vector.extract_strided_slice %274 {offsets = [1, 0], sizes = [1, 16], strides = [1, 1]} : vector<8x16xf32> to vector<1x16xf32>
    %295 = vector.shape_cast %294 : vector<1x16xf32> to vector<1x16xf32>
    %296 = vector.broadcast %295 : vector<1x16xf32> to vector<8x16xf32>
    %297 = vector.extract_strided_slice %284 {offsets = [0, 1], sizes = [8, 1], strides = [1, 1]} : vector<8x8xf32> to vector<8x1xf32>
    %298 = vector.extract_strided_slice %271 {offsets = [1, 0], sizes = [1, 16], strides = [1, 1]} : vector<8x16xf32> to vector<1x16xf32>
    %299 = vector.broadcast %297 : vector<8x1xf32> to vector<8x16xf32>
    %300 = vector.broadcast %298 : vector<1x16xf32> to vector<8x16xf32>
    %301 = arith.mulf %299, %300 : vector<8x16xf32>
    %302 = vector.extract_strided_slice %274 {offsets = [2, 0], sizes = [1, 16], strides = [1, 1]} : vector<8x16xf32> to vector<1x16xf32>
    %303 = vector.shape_cast %302 : vector<1x16xf32> to vector<1x16xf32>
    %304 = vector.broadcast %303 : vector<1x16xf32> to vector<8x16xf32>
    %305 = vector.extract_strided_slice %284 {offsets = [0, 2], sizes = [8, 1], strides = [1, 1]} : vector<8x8xf32> to vector<8x1xf32>
    %306 = vector.extract_strided_slice %271 {offsets = [2, 0], sizes = [1, 16], strides = [1, 1]} : vector<8x16xf32> to vector<1x16xf32>
    %307 = vector.broadcast %305 : vector<8x1xf32> to vector<8x16xf32>
    %308 = vector.broadcast %306 : vector<1x16xf32> to vector<8x16xf32>
    %309 = arith.mulf %307, %308 : vector<8x16xf32>
    %310 = vector.extract_strided_slice %274 {offsets = [3, 0], sizes = [1, 16], strides = [1, 1]} : vector<8x16xf32> to vector<1x16xf32>
    %311 = vector.shape_cast %310 : vector<1x16xf32> to vector<1x16xf32>
    %312 = vector.broadcast %311 : vector<1x16xf32> to vector<8x16xf32>
    %313 = vector.extract_strided_slice %284 {offsets = [0, 3], sizes = [8, 1], strides = [1, 1]} : vector<8x8xf32> to vector<8x1xf32>
    %314 = vector.extract_strided_slice %271 {offsets = [3, 0], sizes = [1, 16], strides = [1, 1]} : vector<8x16xf32> to vector<1x16xf32>
    %315 = vector.broadcast %313 : vector<8x1xf32> to vector<8x16xf32>
    %316 = vector.broadcast %314 : vector<1x16xf32> to vector<8x16xf32>
    %317 = arith.mulf %315, %316 : vector<8x16xf32>
    %318 = vector.extract_strided_slice %274 {offsets = [4, 0], sizes = [1, 16], strides = [1, 1]} : vector<8x16xf32> to vector<1x16xf32>
    %319 = vector.shape_cast %318 : vector<1x16xf32> to vector<1x16xf32>
    %320 = vector.broadcast %319 : vector<1x16xf32> to vector<8x16xf32>
    %321 = vector.extract_strided_slice %284 {offsets = [0, 4], sizes = [8, 1], strides = [1, 1]} : vector<8x8xf32> to vector<8x1xf32>
    %322 = vector.extract_strided_slice %271 {offsets = [4, 0], sizes = [1, 16], strides = [1, 1]} : vector<8x16xf32> to vector<1x16xf32>
    %323 = vector.broadcast %321 : vector<8x1xf32> to vector<8x16xf32>
    %324 = vector.broadcast %322 : vector<1x16xf32> to vector<8x16xf32>
    %325 = arith.mulf %323, %324 : vector<8x16xf32>
    %326 = vector.extract_strided_slice %274 {offsets = [5, 0], sizes = [1, 16], strides = [1, 1]} : vector<8x16xf32> to vector<1x16xf32>
    %327 = vector.shape_cast %326 : vector<1x16xf32> to vector<1x16xf32>
    %328 = vector.broadcast %327 : vector<1x16xf32> to vector<8x16xf32>
    %329 = vector.extract_strided_slice %284 {offsets = [0, 5], sizes = [8, 1], strides = [1, 1]} : vector<8x8xf32> to vector<8x1xf32>
    %330 = vector.extract_strided_slice %271 {offsets = [5, 0], sizes = [1, 16], strides = [1, 1]} : vector<8x16xf32> to vector<1x16xf32>
    %331 = vector.broadcast %329 : vector<8x1xf32> to vector<8x16xf32>
    %332 = vector.broadcast %330 : vector<1x16xf32> to vector<8x16xf32>
    %333 = arith.mulf %331, %332 : vector<8x16xf32>
    %334 = vector.extract_strided_slice %274 {offsets = [6, 0], sizes = [1, 16], strides = [1, 1]} : vector<8x16xf32> to vector<1x16xf32>
    %335 = vector.shape_cast %334 : vector<1x16xf32> to vector<1x16xf32>
    %336 = vector.broadcast %335 : vector<1x16xf32> to vector<8x16xf32>
    %337 = vector.extract_strided_slice %284 {offsets = [0, 6], sizes = [8, 1], strides = [1, 1]} : vector<8x8xf32> to vector<8x1xf32>
    %338 = vector.extract_strided_slice %271 {offsets = [6, 0], sizes = [1, 16], strides = [1, 1]} : vector<8x16xf32> to vector<1x16xf32>
    %339 = vector.broadcast %337 : vector<8x1xf32> to vector<8x16xf32>
    %340 = vector.broadcast %338 : vector<1x16xf32> to vector<8x16xf32>
    %341 = arith.mulf %339, %340 : vector<8x16xf32>
    %342 = vector.extract_strided_slice %274 {offsets = [7, 0], sizes = [1, 16], strides = [1, 1]} : vector<8x16xf32> to vector<1x16xf32>
    %343 = vector.shape_cast %342 : vector<1x16xf32> to vector<1x16xf32>
    %344 = vector.broadcast %343 : vector<1x16xf32> to vector<8x16xf32>
    %345 = vector.extract_strided_slice %284 {offsets = [0, 7], sizes = [8, 1], strides = [1, 1]} : vector<8x8xf32> to vector<8x1xf32>
    %346 = vector.extract_strided_slice %271 {offsets = [7, 0], sizes = [1, 16], strides = [1, 1]} : vector<8x16xf32> to vector<1x16xf32>
    %347 = vector.broadcast %345 : vector<8x1xf32> to vector<8x16xf32>
    %348 = vector.broadcast %346 : vector<1x16xf32> to vector<8x16xf32>
    %349 = arith.mulf %347, %348 : vector<8x16xf32>
    %350 = tpu.concatenate %288, %293, %296, %301, %304, %309, %312, %317, %320, %325, %328, %333, %336, %341, %344, %349 in 1 : vector<8x16xf32>, vector<8x16xf32>, vector<8x16xf32>, vector<8x16xf32>, vector<8x16xf32>, vector<8x16xf32>, vector<8x16xf32>, vector<8x16xf32>, vector<8x16xf32>, vector<8x16xf32>, vector<8x16xf32>, vector<8x16xf32>, vector<8x16xf32>, vector<8x16xf32>, vector<8x16xf32>, vector<8x16xf32> -> vector<8x256xf32>
    %351 = tpu.concatenate %273, %285 in 1 : vector<8x16xf32>, vector<8x16xf32> -> vector<8x32xf32>
    %352 = tpu.concatenate %350, %351 in 1 : vector<8x256xf32>, vector<8x32xf32> -> vector<8x288xf32>
    %c3 = arith.constant 3 : index
    %c0_35 = arith.constant 0 : index
    %c0_36 = arith.constant 0 : index
    %353 = vector.load %arg7[%c3, %c0_35, %c0_36] : memref<4x8x288xf32, #tpu.memory_space<vmem>>, vector<1x8x288xf32>
    %354 = vector.shape_cast %353 : vector<1x8x288xf32> to vector<8x288xf32>
    %355 = vector.shape_cast %352 : vector<8x288xf32> to vector<1x8x288xf32>
    tpu.vector_store %arg7[%c3, %c0_35, %c0_36], %355 {strides = array<i32>} : memref<4x8x288xf32, #tpu.memory_space<vmem>>, vector<1x8x288xf32>,
    return
  }
  func.func @transform_0(%arg0: i32) -> (i32, i32) {
    %c0_i32 = arith.constant 0 : i32
    %c0_i32_0 = arith.constant 0 : i32
    return %arg0, %c0_i32 : i32, i32
  }
  func.func @transform_1(%arg0: i32) -> (i32, i32) {
    %c0_i32 = arith.constant 0 : i32
    %c0_i32_0 = arith.constant 0 : i32
    return %arg0, %c0_i32 : i32, i32
  }
  func.func @transform_2(%arg0: i32) -> (i32, i32) {
    %c0_i32 = arith.constant 0 : i32
    %c0_i32_0 = arith.constant 0 : i32
    %c0_i32_1 = arith.constant 0 : i32
    return %c0_i32, %c0_i32_0 : i32, i32
  }
  func.func @transform_3(%arg0: i32) -> (i32, i32) {
    %c0_i32 = arith.constant 0 : i32
    %c0_i32_0 = arith.constant 0 : i32
    %c0_i32_1 = arith.constant 0 : i32
    return %c0_i32, %c0_i32_0 : i32, i32
  }
  func.func @transform_4(%arg0: i32) -> (i32, i32) {
    %c0_i32 = arith.constant 0 : i32
    %c0_i32_0 = arith.constant 0 : i32
    %c0_i32_1 = arith.constant 0 : i32
    return %c0_i32, %c0_i32_0 : i32, i32
  }
  func.func @transform_5(%arg0: i32) -> (i32, i32) {
    %c0_i32 = arith.constant 0 : i32
    %c0_i32_0 = arith.constant 0 : i32
    %c0_i32_1 = arith.constant 0 : i32
    return %c0_i32, %c0_i32_0 : i32, i32
  }
  func.func @transform_6(%arg0: i32) -> (i32, i32, i32) {
    %c0_i32 = arith.constant 0 : i32
    %c0_i32_0 = arith.constant 0 : i32
    %c0_i32_1 = arith.constant 0 : i32
    return %arg0, %c0_i32, %c0_i32_0 : i32, i32, i32
  }
}

</mosaic_0001>

<llo_original>
// kernel: tpu_custom_call.1
$region0: #{tpu_custom_call.1}
  #allocation0 [shape = 'u32[]', space=smem, size = 0x4, offset = 0x4, fixed_abs, tag = 'smem constant byte address 0x4 - core index']
  #allocation1 [shape = 'u32[144,128]{1,0:T(1,128)}', space=vmem, size = 0x12000, scoped, tag = 'internal scratch']
  %s0 = inlined_call_operand.vmem [shape: f32[32,16], index: 0, kind: input, shape index: {}]
  %s1 = inlined_call_operand.vmem [shape: f32[32,32], index: 1, kind: input, shape index: {}]
  %s2 = inlined_call_operand.vmem [shape: f32[16,48], index: 2, kind: input, shape index: {}]
  %s3 = inlined_call_operand.vmem [shape: f32[1,48], index: 3, kind: input, shape index: {}]
  %s4 = inlined_call_operand.hbm [shape: f32[32,48], index: 4, kind: input, shape index: {}]
  %s5 = inlined_call_operand.vmem [shape: f32[1,48], index: 5, kind: input, shape index: {}]
  %s6 = inlined_call_operand.hbm [shape: f32[4,8,288], index: 6, kind: output, shape index: {}]
  %s7 = sld [smem:[#allocation0]]
  $region38: #{tpu_custom_call.1} parent=0
    _
  %s9 = ssub.s32 1, %s7
  %s10 = scalar_select 0, %s9, %s7
  $region1: #{tpu_custom_call.1} parent=0
    #allocation2 [shape = 'u8[16384]{0}', space=vmem, size = 0x4000, scoped, tag = 'input window, operand 4, single buffered']
    #allocation3 [shape = 's32[1]{0}', space=sflag, size = 0x4, scoped, tag = 'scoped memory for tpu_custom_call.1']
    #allocation4 [shape = 's32[1]{0}', space=sflag, size = 0x4, scoped, tag = 'scoped memory for tpu_custom_call.1']
    #allocation5 [shape = 'u8[49152]{0}', space=vmem, size = 0xc000, scoped, tag = 'output window, operand 0, single buffered']
    %11 = vsyncpa [#allocation3], 0
    %12 = vsyncpa [#allocation4], 0
    // Predicated region
    $region2: #{tpu_custom_call.1} parent=1 // pred_check
      _
    $region3: #{tpu_custom_call.1} parent=1 // pred_check_branch
      %14 = sbr.rel (0) target = $region5
    $region4: #{tpu_custom_call.1} parent=1 // pred_region
      _
    $region5: #{tpu_custom_call.1} parent=1 // pred_fallthru
      _
    // Predicated region
    $region6: #{tpu_custom_call.1} parent=1 // pred_check
      _
    $region7: #{tpu_custom_call.1} parent=1 // pred_check_branch
      %16 = sbr.rel (0) target = $region9
    $region8: #{tpu_custom_call.1} parent=1 // pred_region
      _
    $region9: #{tpu_custom_call.1} parent=1 // pred_fallthru
      _
    // Predicated region
    $region10: #{tpu_custom_call.1} parent=1 // pred_check
      _
    $region11: #{tpu_custom_call.1} parent=1 // pred_check_branch
      %18 = sbr.rel (0) target = $region13
    $region12: #{tpu_custom_call.1} parent=1 // pred_region
      _
    $region13: #{tpu_custom_call.1} parent=1 // pred_fallthru
      _
    // Predicated region
    $region14: #{tpu_custom_call.1} parent=1 // pred_check
      _
    $region15: #{tpu_custom_call.1} parent=1 // pred_check_branch
      %20 = sbr.rel (0) target = $region17
    $region16: #{tpu_custom_call.1} parent=1 // pred_region
      _
    $region17: #{tpu_custom_call.1} parent=1 // pred_fallthru
      _
    // Predicated region
    $region18: #{tpu_custom_call.1} parent=1 // pred_check
      _
    $region19: #{tpu_custom_call.1} parent=1 // pred_check_branch
      %22 = sbr.rel (0) target = $region21
    $region20: #{tpu_custom_call.1} parent=1 // pred_region
      %s24 = ssub.s32 512, 512
      %25 = vsyncadd [#allocation3], %s24
      %s26 = sshll.u32 [#allocation2], 4
      %s27 = int_to_ptr.vmem [resolvable:$true] %s26
      %32 = dma.hbm_to_vmem [thread:$0]  %s4, 512, %s27, [#allocation3], 128, 128, 8
    $region21: #{tpu_custom_call.1} parent=1 // pred_fallthru
      _
    // Predicated region
    $region22: #{tpu_custom_call.1} parent=1 // pred_check
      _
    $region23: #{tpu_custom_call.1} parent=1 // pred_check_branch
      %34 = sbr.rel (0) target = $region25
    $region24: #{tpu_custom_call.1} parent=1 // pred_region
      _
    $region25: #{tpu_custom_call.1} parent=1 // pred_fallthru
      _
    // Predicated region
    $region26: #{tpu_custom_call.1} parent=1 // pred_check
      _
    $region27: #{tpu_custom_call.1} parent=1 // pred_check_branch
      %36 = sbr.rel (0) target = $region29
    $region28: #{tpu_custom_call.1} parent=1 // pred_region
      %37 = dma.done [#allocation3], 512
    $region29: #{tpu_custom_call.1} parent=1 // pred_fallthru
      _
    %v38 = vld [vmem:[%s0] sm:$0xff]
    %v39 = vld [vmem:[%s0 + $0x8] sm:$0xff]
    %v40 = vld [vmem:[%s0 + $0x10] sm:$0xff]
    %v41 = vld [vmem:[%s0 + $0x18] sm:$0xff]
    %v42 = vld [vmem:[%s2] sm:$0xff]
    %v43 = vld [vmem:[%s2 + $0x8] sm:$0xff]
    %v44 = vld [vmem:[%s3] sm:$0x1]
    %v46 = vlaneseq
    %v47 = vshrl.u32 %v46, 7
    %v48 = vsub.s32 0, %v47
    %v49 = vrot.slane %v44, %v48
    %vm51 = vcmask 130048
    %v53 = vsel %vm51, %v38, 0
    %v56 = vsel %vm51, %v39, 0
    %v59 = vsel %vm51, %v40, 0
    %v62 = vsel %vm51, %v41, 0
    %64 = vmatprep.subr.mxu0 0.0
    %65 = vmatpush1.msra.mxu0 0.0
    %66 = vmatprep.subr.mxu0 0.0
    %67 = vmatpush1.msra.mxu0 0.0
    %68 = vmatprep.subr.mxu0 0.0
    %69 = vmatpush1.msra.mxu0 0.0
    %70 = vmatprep.subr.mxu0 0.0
    %71 = vmatpush1.msra.mxu0 0.0
    %72 = vmatprep.subr.mxu0 0.0
    %73 = vmatpush1.msra.mxu0 0.0
    %74 = vmatprep.subr.mxu0 0.0
    %75 = vmatpush1.msra.mxu0 0.0
    %76 = vmatprep.subr.mxu0 0.0
    %77 = vmatpush1.msra.mxu0 0.0
    %78 = vmatprep.subr.mxu0 0.0
    %79 = vmatpush1.msra.mxu0 0.0
    %80 = vmatprep.subr.mxu0 0.0
    %81 = vmatpush1.msra.mxu0 0.0
    %82 = vmatprep.subr.mxu0 0.0
    %83 = vmatpush1.msra.mxu0 0.0
    %84 = vmatprep.subr.mxu0 0.0
    %85 = vmatpush1.msra.mxu0 0.0
    %86 = vmatprep.subr.mxu0 0.0
    %87 = vmatpush1.msra.mxu0 0.0
    %88 = vmatprep.subr.mxu0 0.0
    %89 = vmatpush1.msra.mxu0 0.0
    %90 = vmatprep.subr.mxu0 0.0
    %91 = vmatpush1.msra.mxu0 0.0
    %92 = vmatprep.subr.mxu0 0.0
    %93 = vmatpush1.msra.mxu0 %v43
    %94 = vmatprep.subr.mxu0 0.0
    %95 = vmatpush1.msra.mxu0 %v42
    %96 = vmatprep.subr.mxu0 0.0
    %97 = vmatpush2.msra.mxu0 0.0
    %98 = vmatprep.subr.mxu0 0.0
    %99 = vmatpush2.msra.mxu0 0.0
    %100 = vmatprep.subr.mxu0 0.0
    %101 = vmatpush2.msra.mxu0 0.0
    %102 = vmatprep.subr.mxu0 0.0
    %103 = vmatpush2.msra.mxu0 0.0
    %104 = vmatprep.subr.mxu0 0.0
    %105 = vmatpush2.msra.mxu0 0.0
    %106 = vmatprep.subr.mxu0 0.0
    %107 = vmatpush2.msra.mxu0 0.0
    %108 = vmatprep.subr.mxu0 0.0
    %109 = vmatpush2.msra.mxu0 0.0
    %110 = vmatprep.subr.mxu0 0.0
    %111 = vmatpush2.msra.mxu0 0.0
    %112 = vmatprep.subr.mxu0 0.0
    %113 = vmatpush2.msra.mxu0 0.0
    %114 = vmatprep.subr.mxu0 0.0
    %115 = vmatpush2.msra.mxu0 0.0
    %116 = vmatprep.subr.mxu0 0.0
    %117 = vmatpush2.msra.mxu0 0.0
    %118 = vmatprep.subr.mxu0 0.0
    %119 = vmatpush2.msra.mxu0 0.0
    %120 = vmatprep.subr.mxu0 0.0
    %121 = vmatpush2.msra.mxu0 0.0
    %122 = vmatprep.subr.mxu0 0.0
    %123 = vmatpush2.msra.mxu0 0.0
    %124 = vmatprep.subr.mxu0 0.0
    %125 = vmatpush2.msra.mxu0 0.0
    %126 = vmatprep.subr.mxu0 0.0
    %127 = vmatpush2.msra.mxu0 0.0
    %128 = vmatprep.mubr.f32.mxu0 0.0
    %129 = vmatmul.mubr.f32.gmra.mxu0 %v53
    %v130 = vpop.f32.mrf.mxu0
    %v131 = vadd.f32 %v49, %v130
    %v132 = vpop.f32.mrf.mxu0
    %133 = vmatprep.mubr.f32.mxu0 0.0
    %134 = vmatmul.mubr.f32.gmra.mxu0 %v56
    %v135 = vpop.f32.mrf.mxu0
    %v136 = vadd.f32 %v49, %v135
    %v137 = vpop.f32.mrf.mxu0
    %138 = vmatprep.mubr.f32.mxu0 0.0
    %139 = vmatmul.mubr.f32.gmra.mxu0 %v59
    %v140 = vpop.f32.mrf.mxu0
    %v141 = vadd.f32 %v49, %v140
    %v142 = vpop.f32.mrf.mxu0
    %143 = vmatprep.mubr.f32.mxu0 0.0
    %144 = vmatmul.mubr.f32.gmra.mxu0 %v62
    %v145 = vpop.f32.mrf.mxu0
    %v146 = vadd.f32 %v49, %v145
    %v147 = vpop.f32.mrf.mxu0
    %148 = vdwg.mxu0
    %v149 = vld [vmem:[%s1] sm:$0xff]
    %v150 = vld [vmem:[%s1 + $0x8] sm:$0xff]
    %v151 = vld [vmem:[%s1 + $0x10] sm:$0xff]
    %v152 = vld [vmem:[%s1 + $0x18] sm:$0xff]
    %v153 = vld [vmem:[#allocation2] sm:$0xff]
    %v154 = vld [vmem:[#allocation2 + $0x8] sm:$0xff]
    %v155 = vld [vmem:[#allocation2 + $0x10] sm:$0xff]
    %v156 = vld [vmem:[#allocation2 + $0x18] sm:$0xff]
    %v157 = vld [vmem:[%s5] sm:$0x1]
    %v159 = vlaneseq
    %v160 = vshrl.u32 %v159, 7
    %v161 = vsub.s32 0, %v160
    %v162 = vrot.slane %v157, %v161
    %vm164 = vcmask 261120
    %v166 = vsel %vm164, %v149, 0
    %v169 = vsel %vm164, %v150, 0
    %v172 = vsel %vm164, %v151, 0
    %v175 = vsel %vm164, %v152, 0
    %177 = vmatprep.subr.mxu0 0.0
    %178 = vmatpush1.msra.mxu0 0.0
    %179 = vmatprep.subr.mxu0 0.0
    %180 = vmatpush1.msra.mxu0 0.0
    %181 = vmatprep.subr.mxu0 0.0
    %182 = vmatpush1.msra.mxu0 0.0
    %183 = vmatprep.subr.mxu0 0.0
    %184 = vmatpush1.msra.mxu0 0.0
    %185 = vmatprep.subr.mxu0 0.0
    %186 = vmatpush1.msra.mxu0 0.0
    %187 = vmatprep.subr.mxu0 0.0
    %188 = vmatpush1.msra.mxu0 0.0
    %189 = vmatprep.subr.mxu0 0.0
    %190 = vmatpush1.msra.mxu0 0.0
    %191 = vmatprep.subr.mxu0 0.0
    %192 = vmatpush1.msra.mxu0 0.0
    %193 = vmatprep.subr.mxu0 0.0
    %194 = vmatpush1.msra.mxu0 0.0
    %195 = vmatprep.subr.mxu0 0.0
    %196 = vmatpush1.msra.mxu0 0.0
    %197 = vmatprep.subr.mxu0 0.0
    %198 = vmatpush1.msra.mxu0 0.0
    %199 = vmatprep.subr.mxu0 0.0
    %200 = vmatpush1.msra.mxu0 0.0
    %201 = vmatprep.subr.mxu0 0.0
    %202 = vmatpush1.msra.mxu0 %v156
    %203 = vmatprep.subr.mxu0 0.0
    %204 = vmatpush1.msra.mxu0 %v155
    %205 = vmatprep.subr.mxu0 0.0
    %206 = vmatpush1.msra.mxu0 %v154
    %207 = vmatprep.subr.mxu0 0.0
    %208 = vmatpush1.msra.mxu0 %v153
    %209 = vmatprep.subr.mxu0 0.0
    %210 = vmatpush2.msra.mxu0 0.0
    %211 = vmatprep.subr.mxu0 0.0
    %212 = vmatpush2.msra.mxu0 0.0
    %213 = vmatprep.subr.mxu0 0.0
    %214 = vmatpush2.msra.mxu0 0.0
    %215 = vmatprep.subr.mxu0 0.0
    %216 = vmatpush2.msra.mxu0 0.0
    %217 = vmatprep.subr.mxu0 0.0
    %218 = vmatpush2.msra.mxu0 0.0
    %219 = vmatprep.subr.mxu0 0.0
    %220 = vmatpush2.msra.mxu0 0.0
    %221 = vmatprep.subr.mxu0 0.0
    %222 = vmatpush2.msra.mxu0 0.0
    %223 = vmatprep.subr.mxu0 0.0
    %224 = vmatpush2.msra.mxu0 0.0
    %225 = vmatprep.subr.mxu0 0.0
    %226 = vmatpush2.msra.mxu0 0.0
    %227 = vmatprep.subr.mxu0 0.0
    %228 = vmatpush2.msra.mxu0 0.0
    %229 = vmatprep.subr.mxu0 0.0
    %230 = vmatpush2.msra.mxu0 0.0
    %231 = vmatprep.subr.mxu0 0.0
    %232 = vmatpush2.msra.mxu0 0.0
    %233 = vmatprep.subr.mxu0 0.0
    %234 = vmatpush2.msra.mxu0 0.0
    %235 = vmatprep.subr.mxu0 0.0
    %236 = vmatpush2.msra.mxu0 0.0
    %237 = vmatprep.subr.mxu0 0.0
    %238 = vmatpush2.msra.mxu0 0.0
    %239 = vmatprep.subr.mxu0 0.0
    %240 = vmatpush2.msra.mxu0 0.0
    %241 = vmatprep.mubr.f32.mxu0 0.0
    %242 = vmatmul.mubr.f32.gmra.mxu0 %v166
    %v243 = vpop.f32.mrf.mxu0
    %v244 = vadd.f32 %v162, %v243
    %v245 = vpop.f32.mrf.mxu0
    %246 = vmatprep.mubr.f32.mxu0 0.0
    %247 = vmatmul.mubr.f32.gmra.mxu0 %v169
    %v248 = vpop.f32.mrf.mxu0
    %v249 = vadd.f32 %v162, %v248
    %v250 = vpop.f32.mrf.mxu0
    %251 = vmatprep.mubr.f32.mxu0 0.0
    %252 = vmatmul.mubr.f32.gmra.mxu0 %v172
    %v253 = vpop.f32.mrf.mxu0
    %v254 = vadd.f32 %v162, %v253
    %v255 = vpop.f32.mrf.mxu0
    %256 = vmatprep.mubr.f32.mxu0 0.0
    %257 = vmatmul.mubr.f32.gmra.mxu0 %v175
    %v258 = vpop.f32.mrf.mxu0
    %v259 = vadd.f32 %v162, %v258
    %v260 = vpop.f32.mrf.mxu0
    %261 = vdwg.mxu0
    %v263 = vsel %vm164, %v244, 0
    %v266 = vsel %vm164, %v131, 0
    %268 = vmatprep.subr.mxu0 0.0
    %269 = vmatpush1.xpose.msra.mxu0 0.0
    %270 = vmatprep.subr.mxu0 0.0
    %271 = vmatpush1.xpose.msra.mxu0 0.0
    %272 = vmatprep.subr.mxu0 0.0
    %273 = vmatpush1.xpose.msra.mxu0 0.0
    %274 = vmatprep.subr.mxu0 0.0
    %275 = vmatpush1.xpose.msra.mxu0 0.0
    %276 = vmatprep.subr.mxu0 0.0
    %277 = vmatpush1.xpose.msra.mxu0 0.0
    %278 = vmatprep.subr.mxu0 0.0
    %279 = vmatpush1.xpose.msra.mxu0 0.0
    %280 = vmatprep.subr.mxu0 0.0
    %281 = vmatpush1.xpose.msra.mxu0 0.0
    %282 = vmatprep.subr.mxu0 0.0
    %283 = vmatpush1.xpose.msra.mxu0 0.0
    %284 = vmatprep.subr.mxu0 0.0
    %285 = vmatpush1.xpose.msra.mxu0 0.0
    %286 = vmatprep.subr.mxu0 0.0
    %287 = vmatpush1.xpose.msra.mxu0 0.0
    %288 = vmatprep.subr.mxu0 0.0
    %289 = vmatpush1.xpose.msra.mxu0 0.0
    %290 = vmatprep.subr.mxu0 0.0
    %291 = vmatpush1.xpose.msra.mxu0 0.0
    %292 = vmatprep.subr.mxu0 0.0
    %293 = vmatpush1.xpose.msra.mxu0 0.0
    %294 = vmatprep.subr.mxu0 0.0
    %295 = vmatpush1.xpose.msra.mxu0 0.0
    %296 = vmatprep.subr.mxu0 0.0
    %297 = vmatpush1.xpose.msra.mxu0 0.0
    %298 = vmatprep.subr.mxu0 0.0
    %299 = vmatpush1.xpose.msra.mxu0 %v266
    %300 = vmatprep.subr.mxu0 0.0
    %301 = vmatpush2.xpose.msra.mxu0 0.0
    %302 = vmatprep.subr.mxu0 0.0
    %303 = vmatpush2.xpose.msra.mxu0 0.0
    %304 = vmatprep.subr.mxu0 0.0
    %305 = vmatpush2.xpose.msra.mxu0 0.0
    %306 = vmatprep.subr.mxu0 0.0
    %307 = vmatpush2.xpose.msra.mxu0 0.0
    %308 = vmatprep.subr.mxu0 0.0
    %309 = vmatpush2.xpose.msra.mxu0 0.0
    %310 = vmatprep.subr.mxu0 0.0
    %311 = vmatpush2.xpose.msra.mxu0 0.0
    %312 = vmatprep.subr.mxu0 0.0
    %313 = vmatpush2.xpose.msra.mxu0 0.0
    %314 = vmatprep.subr.mxu0 0.0
    %315 = vmatpush2.xpose.msra.mxu0 0.0
    %316 = vmatprep.subr.mxu0 0.0
    %317 = vmatpush2.xpose.msra.mxu0 0.0
    %318 = vmatprep.subr.mxu0 0.0
    %319 = vmatpush2.xpose.msra.mxu0 0.0
    %320 = vmatprep.subr.mxu0 0.0
    %321 = vmatpush2.xpose.msra.mxu0 0.0
    %322 = vmatprep.subr.mxu0 0.0
    %323 = vmatpush2.xpose.msra.mxu0 0.0
    %324 = vmatprep.subr.mxu0 0.0
    %325 = vmatpush2.xpose.msra.mxu0 0.0
    %326 = vmatprep.subr.mxu0 0.0
    %327 = vmatpush2.xpose.msra.mxu0 0.0
    %328 = vmatprep.subr.mxu0 0.0
    %329 = vmatpush2.xpose.msra.mxu0 0.0
    %330 = vmatprep.subr.mxu0 0.0
    %331 = vmatpush2.xpose.msra.mxu0 0.0
    %332 = vmatprep.mubr.f32.mxu0 0.0
    %333 = vmatmul.mubr.f32.gmra.mxu0 %v263
    %v334 = vpop.f32.mrf.mxu0
    %v335 = vadd.f32 0.0, %v334
    %v336 = vpop.f32.mrf.mxu0
    %337 = vdwg.mxu0
    %vm338 = vcmask 64512
    %v339 = vsel %vm338, %v335, -inf
    %340 = vmax.xlane.f32.xlu0 %v339
    %v341 = vpop.xlane.xlu0 %340
    %v342 = vsub.f32 %v335, %v341
    %v343 = vmul.f32 %v342, 1.442695
    %v344 = vpow.pop %v343
    %v345 = vsel %vm338, %v344, 0.0
    %346 = vadd.xlane.f32.xlu0 %v345
    %v347 = vpop.xlane.xlu0 %346
    %v348 = vrcp.pop %v347
    %v349 = vmul.f32 %v344, %v348
    %350 = vrot.lane.b32.xlu0 %v131, 96
    %v351 = vpop.permute.xlu0 %350
    %v354 = vsel %vm338, %v349, 0
    %356 = vmatprep.subr.mxu0 0.0
    %357 = vmatpush1.msra.mxu0 0.0
    %358 = vmatprep.subr.mxu0 0.0
    %359 = vmatpush1.msra.mxu0 0.0
    %360 = vmatprep.subr.mxu0 0.0
    %361 = vmatpush1.msra.mxu0 0.0
    %362 = vmatprep.subr.mxu0 0.0
    %363 = vmatpush1.msra.mxu0 0.0
    %364 = vmatprep.subr.mxu0 0.0
    %365 = vmatpush1.msra.mxu0 0.0
    %366 = vmatprep.subr.mxu0 0.0
    %367 = vmatpush1.msra.mxu0 0.0
    %368 = vmatprep.subr.mxu0 0.0
    %369 = vmatpush1.msra.mxu0 0.0
    %370 = vmatprep.subr.mxu0 0.0
    %371 = vmatpush1.msra.mxu0 0.0
    %372 = vmatprep.subr.mxu0 0.0
    %373 = vmatpush1.msra.mxu0 0.0
    %374 = vmatprep.subr.mxu0 0.0
    %375 = vmatpush1.msra.mxu0 0.0
    %376 = vmatprep.subr.mxu0 0.0
    %377 = vmatpush1.msra.mxu0 0.0
    %378 = vmatprep.subr.mxu0 0.0
    %379 = vmatpush1.msra.mxu0 0.0
    %380 = vmatprep.subr.mxu0 0.0
    %381 = vmatpush1.msra.mxu0 0.0
    %382 = vmatprep.subr.mxu0 0.0
    %383 = vmatpush1.msra.mxu0 0.0
    %384 = vmatprep.subr.mxu0 0.0
    %385 = vmatpush1.msra.mxu0 0.0
    %386 = vmatprep.subr.mxu0 0.0
    %387 = vmatpush1.msra.mxu0 %v351
    %388 = vmatprep.subr.mxu0 0.0
    %389 = vmatpush2.msra.mxu0 0.0
    %390 = vmatprep.subr.mxu0 0.0
    %391 = vmatpush2.msra.mxu0 0.0
    %392 = vmatprep.subr.mxu0 0.0
    %393 = vmatpush2.msra.mxu0 0.0
    %394 = vmatprep.subr.mxu0 0.0
    %395 = vmatpush2.msra.mxu0 0.0
    %396 = vmatprep.subr.mxu0 0.0
    %397 = vmatpush2.msra.mxu0 0.0
    %398 = vmatprep.subr.mxu0 0.0
    %399 = vmatpush2.msra.mxu0 0.0
    %400 = vmatprep.subr.mxu0 0.0
    %401 = vmatpush2.msra.mxu0 0.0
    %402 = vmatprep.subr.mxu0 0.0
    %403 = vmatpush2.msra.mxu0 0.0
    %404 = vmatprep.subr.mxu0 0.0
    %405 = vmatpush2.msra.mxu0 0.0
    %406 = vmatprep.subr.mxu0 0.0
    %407 = vmatpush2.msra.mxu0 0.0
    %408 = vmatprep.subr.mxu0 0.0
    %409 = vmatpush2.msra.mxu0 0.0
    %410 = vmatprep.subr.mxu0 0.0
    %411 = vmatpush2.msra.mxu0 0.0
    %412 = vmatprep.subr.mxu0 0.0
    %413 = vmatpush2.msra.mxu0 0.0
    %414 = vmatprep.subr.mxu0 0.0
    %415 = vmatpush2.msra.mxu0 0.0
    %416 = vmatprep.subr.mxu0 0.0
    %417 = vmatpush2.msra.mxu0 0.0
    %418 = vmatprep.subr.mxu0 0.0
    %419 = vmatpush2.msra.mxu0 0.0
    %420 = vmatprep.mubr.f32.mxu0 0.0
    %421 = vmatmul.mubr.f32.gmra.mxu0 %v354
    %v422 = vpop.f32.mrf.mxu0
    %v423 = vadd.f32 0.0, %v422
    %v424 = vpop.f32.mrf.mxu0
    %425 = vdwg.mxu0
    %v426 = vlaneseq
    %v427 = vshrl.u32 %v426, 7
    %v428 = vsub.s32 0, %v427
    %v429 = vrot.slane %v38, %v428
    %430 = vset.pattern.permute.xlu0 0
    %431 = vperm.xlu0 %430, %v349
    %v432 = vpop.permute.xlu0 %431
    %v434 = vlaneseq
    %v435 = vshrl.u32 %v434, 7
    %v436 = vsub.s32 0, %v435
    %v437 = vrot.slane %v131, %v436
    %v438 = vmul.f32 %v432, %v437
    %v439 = vlaneseq
    %v440 = vshrl.u32 %v439, 7
    %v441 = vsub.s32 1, %v440
    %v442 = vrot.slane %v38, %v441
    %443 = vset.pattern.permute.xlu0 1
    %444 = vperm.xlu0 %443, %v349
    %v445 = vpop.permute.xlu0 %444
    %v447 = vlaneseq
    %v448 = vshrl.u32 %v447, 7
    %v449 = vsub.s32 1, %v448
    %v450 = vrot.slane %v131, %v449
    %v451 = vmul.f32 %v445, %v450
    %v452 = vlaneseq
    %v453 = vshrl.u32 %v452, 7
    %v454 = vsub.s32 2, %v453
    %v455 = vrot.slane %v38, %v454
    %456 = vset.pattern.permute.xlu0 2
    %457 = vperm.xlu0 %456, %v349
    %v458 = vpop.permute.xlu0 %457
    %v460 = vlaneseq
    %v461 = vshrl.u32 %v460, 7
    %v462 = vsub.s32 2, %v461
    %v463 = vrot.slane %v131, %v462
    %v464 = vmul.f32 %v458, %v463
    %v465 = vlaneseq
    %v466 = vshrl.u32 %v465, 7
    %v467 = vsub.s32 3, %v466
    %v468 = vrot.slane %v38, %v467
    %469 = vset.pattern.permute.xlu0 3
    %470 = vperm.xlu0 %469, %v349
    %v471 = vpop.permute.xlu0 %470
    %v473 = vlaneseq
    %v474 = vshrl.u32 %v473, 7
    %v475 = vsub.s32 3, %v474
    %v476 = vrot.slane %v131, %v475
    %v477 = vmul.f32 %v471, %v476
    %v478 = vlaneseq
    %v479 = vshrl.u32 %v478, 7
    %v480 = vsub.s32 4, %v479
    %v481 = vrot.slane %v38, %v480
    %482 = vset.pattern.permute.xlu0 4
    %483 = vperm.xlu0 %482, %v349
    %v484 = vpop.permute.xlu0 %483
    %v486 = vlaneseq
    %v487 = vshrl.u32 %v486, 7
    %v488 = vsub.s32 4, %v487
    %v489 = vrot.slane %v131, %v488
    %v490 = vmul.f32 %v484, %v489
    %v491 = vlaneseq
    %v492 = vshrl.u32 %v491, 7
    %v493 = vsub.s32 5, %v492
    %v494 = vrot.slane %v38, %v493
    %495 = vset.pattern.permute.xlu0 5
    %496 = vperm.xlu0 %495, %v349
    %v497 = vpop.permute.xlu0 %496
    %v499 = vlaneseq
    %v500 = vshrl.u32 %v499, 7
    %v501 = vsub.s32 5, %v500
    %v502 = vrot.slane %v131, %v501
    %v503 = vmul.f32 %v497, %v502
    %v504 = vlaneseq
    %v505 = vshrl.u32 %v504, 7
    %v506 = vsub.s32 6, %v505
    %v507 = vrot.slane %v38, %v506
    %508 = vset.pattern.permute.xlu0 6
    %509 = vperm.xlu0 %508, %v349
    %v510 = vpop.permute.xlu0 %509
    %v512 = vlaneseq
    %v513 = vshrl.u32 %v512, 7
    %v514 = vsub.s32 6, %v513
    %v515 = vrot.slane %v131, %v514
    %v516 = vmul.f32 %v510, %v515
    %v517 = vlaneseq
    %v518 = vshrl.u32 %v517, 7
    %v519 = vsub.s32 7, %v518
    %v520 = vrot.slane %v38, %v519
    %521 = vset.pattern.permute.xlu0 7
    %522 = vperm.xlu0 %521, %v349
    %v523 = vpop.permute.xlu0 %522
    %v525 = vlaneseq
    %v526 = vshrl.u32 %v525, 7
    %v527 = vsub.s32 7, %v526
    %v528 = vrot.slane %v131, %v527
    %v529 = vmul.f32 %v523, %v528
    %531 = vrot.lane.b32.xlu0 %v438, 112
    %v532 = vpop.permute.xlu0 %531
    %535 = vrot.lane.b32.xlu0 %v442, 32
    %v536 = vpop.permute.xlu0 %535
    %539 = vrot.lane.b32.xlu0 %v451, 16
    %v540 = vpop.permute.xlu0 %539
    %543 = vrot.lane.b32.xlu0 %v455, 64
    %v544 = vpop.permute.xlu0 %543
    %547 = vrot.lane.b32.xlu0 %v464, 48
    %v548 = vpop.permute.xlu0 %547
    %551 = vrot.lane.b32.xlu0 %v468, 96
    %v552 = vpop.permute.xlu0 %551
    %555 = vrot.lane.b32.xlu0 %v477, 80
    %v556 = vpop.permute.xlu0 %555
    %559 = vrot.lane.b32.xlu0 %v490, 112
    %v560 = vpop.permute.xlu0 %559
    %563 = vrot.lane.b32.xlu0 %v494, 32
    %v564 = vpop.permute.xlu0 %563
    %567 = vrot.lane.b32.xlu0 %v503, 16
    %v568 = vpop.permute.xlu0 %567
    %571 = vrot.lane.b32.xlu0 %v507, 64
    %v572 = vpop.permute.xlu0 %571
    %575 = vrot.lane.b32.xlu0 %v516, 48
    %v576 = vpop.permute.xlu0 %575
    %579 = vrot.lane.b32.xlu0 %v520, 96
    %v580 = vpop.permute.xlu0 %579
    %583 = vrot.lane.b32.xlu0 %v529, 80
    %v584 = vpop.permute.xlu0 %583
    %v586 = vsel %vm51, %v429, %v532
    %v587 = vsel %vm164, %v586, %v536
    %vm588 = vcmask 392192
    %v589 = vsel %vm588, %v587, %v540
    %vm590 = vcmask 523264
    %v591 = vsel %vm590, %v589, %v544
    %vm592 = vcmask 654336
    %v593 = vsel %vm592, %v591, %v548
    %vm594 = vcmask 785408
    %v595 = vsel %vm594, %v593, %v552
    %vm596 = vcmask 916480
    %v597 = vsel %vm596, %v595, %v556
    %v598 = vsel %vm51, %v481, %v560
    %v599 = vsel %vm164, %v598, %v564
    %v600 = vsel %vm588, %v599, %v568
    %v601 = vsel %vm590, %v600, %v572
    %v602 = vsel %vm592, %v601, %v576
    %v603 = vsel %vm594, %v602, %v580
    %v604 = vsel %vm596, %v603, %v584
    %605 = vrot.lane.b32.xlu0 %v244, 96
    %v606 = vpop.permute.xlu0 %605
    %609 = vrot.lane.b32.xlu0 %v423, 16
    %v610 = vpop.permute.xlu0 %609
    %v612 = vsel %vm51, %v606, %v610
    %613 = vst [vmem:[#allocation5] sm:$0xff] %v597
    %614 = vst [vmem:[#allocation5 + $0x8] sm:$0xff] %v604
    %615 = vst.msk [vmem:[#allocation5 + $0x10] sm:$0xff] %vm164, %v612
    %v617 = vsel %vm164, %v249, 0
    %v620 = vsel %vm164, %v136, 0
    %622 = vmatprep.subr.mxu0 0.0
    %623 = vmatpush1.xpose.msra.mxu0 0.0
    %624 = vmatprep.subr.mxu0 0.0
    %625 = vmatpush1.xpose.msra.mxu0 0.0
    %626 = vmatprep.subr.mxu0 0.0
    %627 = vmatpush1.xpose.msra.mxu0 0.0
    %628 = vmatprep.subr.mxu0 0.0
    %629 = vmatpush1.xpose.msra.mxu0 0.0
    %630 = vmatprep.subr.mxu0 0.0
    %631 = vmatpush1.xpose.msra.mxu0 0.0
    %632 = vmatprep.subr.mxu0 0.0
    %633 = vmatpush1.xpose.msra.mxu0 0.0
    %634 = vmatprep.subr.mxu0 0.0
    %635 = vmatpush1.xpose.msra.mxu0 0.0
    %636 = vmatprep.subr.mxu0 0.0
    %637 = vmatpush1.xpose.msra.mxu0 0.0
    %638 = vmatprep.subr.mxu0 0.0
    %639 = vmatpush1.xpose.msra.mxu0 0.0
    %640 = vmatprep.subr.mxu0 0.0
    %641 = vmatpush1.xpose.msra.mxu0 0.0
    %642 = vmatprep.subr.mxu0 0.0
    %643 = vmatpush1.xpose.msra.mxu0 0.0
    %644 = vmatprep.subr.mxu0 0.0
    %645 = vmatpush1.xpose.msra.mxu0 0.0
    %646 = vmatprep.subr.mxu0 0.0
    %647 = vmatpush1.xpose.msra.mxu0 0.0
    %648 = vmatprep.subr.mxu0 0.0
    %649 = vmatpush1.xpose.msra.mxu0 0.0
    %650 = vmatprep.subr.mxu0 0.0
    %651 = vmatpush1.xpose.msra.mxu0 0.0
    %652 = vmatprep.subr.mxu0 0.0
    %653 = vmatpush1.xpose.msra.mxu0 %v620
    %654 = vmatprep.subr.mxu0 0.0
    %655 = vmatpush2.xpose.msra.mxu0 0.0
    %656 = vmatprep.subr.mxu0 0.0
    %657 = vmatpush2.xpose.msra.mxu0 0.0
    %658 = vmatprep.subr.mxu0 0.0
    %659 = vmatpush2.xpose.msra.mxu0 0.0
    %660 = vmatprep.subr.mxu0 0.0
    %661 = vmatpush2.xpose.msra.mxu0 0.0
    %662 = vmatprep.subr.mxu0 0.0
    %663 = vmatpush2.xpose.msra.mxu0 0.0
    %664 = vmatprep.subr.mxu0 0.0
    %665 = vmatpush2.xpose.msra.mxu0 0.0
    %666 = vmatprep.subr.mxu0 0.0
    %667 = vmatpush2.xpose.msra.mxu0 0.0
    %668 = vmatprep.subr.mxu0 0.0
    %669 = vmatpush2.xpose.msra.mxu0 0.0
    %670 = vmatprep.subr.mxu0 0.0
    %671 = vmatpush2.xpose.msra.mxu0 0.0
    %672 = vmatprep.subr.mxu0 0.0
    %673 = vmatpush2.xpose.msra.mxu0 0.0
    %674 = vmatprep.subr.mxu0 0.0
    %675 = vmatpush2.xpose.msra.mxu0 0.0
    %676 = vmatprep.subr.mxu0 0.0
    %677 = vmatpush2.xpose.msra.mxu0 0.0
    %678 = vmatprep.subr.mxu0 0.0
    %679 = vmatpush2.xpose.msra.mxu0 0.0
    %680 = vmatprep.subr.mxu0 0.0
    %681 = vmatpush2.xpose.msra.mxu0 0.0
    %682 = vmatprep.subr.mxu0 0.0
    %683 = vmatpush2.xpose.msra.mxu0 0.0
    %684 = vmatprep.subr.mxu0 0.0
    %685 = vmatpush2.xpose.msra.mxu0 0.0
    %686 = vmatprep.mubr.f32.mxu0 0.0
    %687 = vmatmul.mubr.f32.gmra.mxu0 %v617
    %v688 = vpop.f32.mrf.mxu0
    %v689 = vadd.f32 0.0, %v688
    %v690 = vpop.f32.mrf.mxu0
    %691 = vdwg.mxu0
    %v692 = vsel %vm338, %v689, -inf
    %693 = vmax.xlane.f32.xlu0 %v692
    %v694 = vpop.xlane.xlu0 %693
    %v695 = vsub.f32 %v689, %v694
    %v696 = vmul.f32 %v695, 1.442695
    %v697 = vpow.pop %v696
    %v698 = vsel %vm338, %v697, 0.0
    %699 = vadd.xlane.f32.xlu0 %v698
    %v700 = vpop.xlane.xlu0 %699
    %v701 = vrcp.pop %v700
    %v702 = vmul.f32 %v697, %v701
    %703 = vrot.lane.b32.xlu0 %v136, 96
    %v704 = vpop.permute.xlu0 %703
    %v707 = vsel %vm338, %v702, 0
    %709 = vmatprep.subr.mxu0 0.0
    %710 = vmatpush1.msra.mxu0 0.0
    %711 = vmatprep.subr.mxu0 0.0
    %712 = vmatpush1.msra.mxu0 0.0
    %713 = vmatprep.subr.mxu0 0.0
    %714 = vmatpush1.msra.mxu0 0.0
    %715 = vmatprep.subr.mxu0 0.0
    %716 = vmatpush1.msra.mxu0 0.0
    %717 = vmatprep.subr.mxu0 0.0
    %718 = vmatpush1.msra.mxu0 0.0
    %719 = vmatprep.subr.mxu0 0.0
    %720 = vmatpush1.msra.mxu0 0.0
    %721 = vmatprep.subr.mxu0 0.0
    %722 = vmatpush1.msra.mxu0 0.0
    %723 = vmatprep.subr.mxu0 0.0
    %724 = vmatpush1.msra.mxu0 0.0
    %725 = vmatprep.subr.mxu0 0.0
    %726 = vmatpush1.msra.mxu0 0.0
    %727 = vmatprep.subr.mxu0 0.0
    %728 = vmatpush1.msra.mxu0 0.0
    %729 = vmatprep.subr.mxu0 0.0
    %730 = vmatpush1.msra.mxu0 0.0
    %731 = vmatprep.subr.mxu0 0.0
    %732 = vmatpush1.msra.mxu0 0.0
    %733 = vmatprep.subr.mxu0 0.0
    %734 = vmatpush1.msra.mxu0 0.0
    %735 = vmatprep.subr.mxu0 0.0
    %736 = vmatpush1.msra.mxu0 0.0
    %737 = vmatprep.subr.mxu0 0.0
    %738 = vmatpush1.msra.mxu0 0.0
    %739 = vmatprep.subr.mxu0 0.0
    %740 = vmatpush1.msra.mxu0 %v704
    %741 = vmatprep.subr.mxu0 0.0
    %742 = vmatpush2.msra.mxu0 0.0
    %743 = vmatprep.subr.mxu0 0.0
    %744 = vmatpush2.msra.mxu0 0.0
    %745 = vmatprep.subr.mxu0 0.0
    %746 = vmatpush2.msra.mxu0 0.0
    %747 = vmatprep.subr.mxu0 0.0
    %748 = vmatpush2.msra.mxu0 0.0
    %749 = vmatprep.subr.mxu0 0.0
    %750 = vmatpush2.msra.mxu0 0.0
    %751 = vmatprep.subr.mxu0 0.0
    %752 = vmatpush2.msra.mxu0 0.0
    %753 = vmatprep.subr.mxu0 0.0
    %754 = vmatpush2.msra.mxu0 0.0
    %755 = vmatprep.subr.mxu0 0.0
    %756 = vmatpush2.msra.mxu0 0.0
    %757 = vmatprep.subr.mxu0 0.0
    %758 = vmatpush2.msra.mxu0 0.0
    %759 = vmatprep.subr.mxu0 0.0
    %760 = vmatpush2.msra.mxu0 0.0
    %761 = vmatprep.subr.mxu0 0.0
    %762 = vmatpush2.msra.mxu0 0.0
    %763 = vmatprep.subr.mxu0 0.0
    %764 = vmatpush2.msra.mxu0 0.0
    %765 = vmatprep.subr.mxu0 0.0
    %766 = vmatpush2.msra.mxu0 0.0
    %767 = vmatprep.subr.mxu0 0.0
    %768 = vmatpush2.msra.mxu0 0.0
    %769 = vmatprep.subr.mxu0 0.0
    %770 = vmatpush2.msra.mxu0 0.0
    %771 = vmatprep.subr.mxu0 0.0
    %772 = vmatpush2.msra.mxu0 0.0
    %773 = vmatprep.mubr.f32.mxu0 0.0
    %774 = vmatmul.mubr.f32.gmra.mxu0 %v707
    %v775 = vpop.f32.mrf.mxu0
    %v776 = vadd.f32 0.0, %v775
    %v777 = vpop.f32.mrf.mxu0
    %778 = vdwg.mxu0
    %v779 = vlaneseq
    %v780 = vshrl.u32 %v779, 7
    %v781 = vsub.s32 0, %v780
    %v782 = vrot.slane %v39, %v781
    %783 = vset.pattern.permute.xlu0 0
    %784 = vperm.xlu0 %783, %v702
    %v785 = vpop.permute.xlu0 %784
    %v787 = vlaneseq
    %v788 = vshrl.u32 %v787, 7
    %v789 = vsub.s32 0, %v788
    %v790 = vrot.slane %v136, %v789
    %v791 = vmul.f32 %v785, %v790
    %v792 = vlaneseq
    %v793 = vshrl.u32 %v792, 7
    %v794 = vsub.s32 1, %v793
    %v795 = vrot.slane %v39, %v794
    %796 = vset.pattern.permute.xlu0 1
    %797 = vperm.xlu0 %796, %v702
    %v798 = vpop.permute.xlu0 %797
    %v800 = vlaneseq
    %v801 = vshrl.u32 %v800, 7
    %v802 = vsub.s32 1, %v801
    %v803 = vrot.slane %v136, %v802
    %v804 = vmul.f32 %v798, %v803
    %v805 = vlaneseq
    %v806 = vshrl.u32 %v805, 7
    %v807 = vsub.s32 2, %v806
    %v808 = vrot.slane %v39, %v807
    %809 = vset.pattern.permute.xlu0 2
    %810 = vperm.xlu0 %809, %v702
    %v811 = vpop.permute.xlu0 %810
    %v813 = vlaneseq
    %v814 = vshrl.u32 %v813, 7
    %v815 = vsub.s32 2, %v814
    %v816 = vrot.slane %v136, %v815
    %v817 = vmul.f32 %v811, %v816
    %v818 = vlaneseq
    %v819 = vshrl.u32 %v818, 7
    %v820 = vsub.s32 3, %v819
    %v821 = vrot.slane %v39, %v820
    %822 = vset.pattern.permute.xlu0 3
    %823 = vperm.xlu0 %822, %v702
    %v824 = vpop.permute.xlu0 %823
    %v826 = vlaneseq
    %v827 = vshrl.u32 %v826, 7
    %v828 = vsub.s32 3, %v827
    %v829 = vrot.slane %v136, %v828
    %v830 = vmul.f32 %v824, %v829
    %v831 = vlaneseq
    %v832 = vshrl.u32 %v831, 7
    %v833 = vsub.s32 4, %v832
    %v834 = vrot.slane %v39, %v833
    %835 = vset.pattern.permute.xlu0 4
    %836 = vperm.xlu0 %835, %v702
    %v837 = vpop.permute.xlu0 %836
    %v839 = vlaneseq
    %v840 = vshrl.u32 %v839, 7
    %v841 = vsub.s32 4, %v840
    %v842 = vrot.slane %v136, %v841
    %v843 = vmul.f32 %v837, %v842
    %v844 = vlaneseq
    %v845 = vshrl.u32 %v844, 7
    %v846 = vsub.s32 5, %v845
    %v847 = vrot.slane %v39, %v846
    %848 = vset.pattern.permute.xlu0 5
    %849 = vperm.xlu0 %848, %v702
    %v850 = vpop.permute.xlu0 %849
    %v852 = vlaneseq
    %v853 = vshrl.u32 %v852, 7
    %v854 = vsub.s32 5, %v853
    %v855 = vrot.slane %v136, %v854
    %v856 = vmul.f32 %v850, %v855
    %v857 = vlaneseq
    %v858 = vshrl.u32 %v857, 7
    %v859 = vsub.s32 6, %v858
    %v860 = vrot.slane %v39, %v859
    %861 = vset.pattern.permute.xlu0 6
    %862 = vperm.xlu0 %861, %v702
    %v863 = vpop.permute.xlu0 %862
    %v865 = vlaneseq
    %v866 = vshrl.u32 %v865, 7
    %v867 = vsub.s32 6, %v866
    %v868 = vrot.slane %v136, %v867
    %v869 = vmul.f32 %v863, %v868
    %v870 = vlaneseq
    %v871 = vshrl.u32 %v870, 7
    %v872 = vsub.s32 7, %v871
    %v873 = vrot.slane %v39, %v872
    %874 = vset.pattern.permute.xlu0 7
    %875 = vperm.xlu0 %874, %v702
    %v876 = vpop.permute.xlu0 %875
    %v878 = vlaneseq
    %v879 = vshrl.u32 %v878, 7
    %v880 = vsub.s32 7, %v879
    %v881 = vrot.slane %v136, %v880
    %v882 = vmul.f32 %v876, %v881
    %884 = vrot.lane.b32.xlu0 %v791, 112
    %v885 = vpop.permute.xlu0 %884
    %888 = vrot.lane.b32.xlu0 %v795, 32
    %v889 = vpop.permute.xlu0 %888
    %892 = vrot.lane.b32.xlu0 %v804, 16
    %v893 = vpop.permute.xlu0 %892
    %896 = vrot.lane.b32.xlu0 %v808, 64
    %v897 = vpop.permute.xlu0 %896
    %900 = vrot.lane.b32.xlu0 %v817, 48
    %v901 = vpop.permute.xlu0 %900
    %904 = vrot.lane.b32.xlu0 %v821, 96
    %v905 = vpop.permute.xlu0 %904
    %908 = vrot.lane.b32.xlu0 %v830, 80
    %v909 = vpop.permute.xlu0 %908
    %912 = vrot.lane.b32.xlu0 %v843, 112
    %v913 = vpop.permute.xlu0 %912
    %916 = vrot.lane.b32.xlu0 %v847, 32
    %v917 = vpop.permute.xlu0 %916
    %920 = vrot.lane.b32.xlu0 %v856, 16
    %v921 = vpop.permute.xlu0 %920
    %924 = vrot.lane.b32.xlu0 %v860, 64
    %v925 = vpop.permute.xlu0 %924
    %928 = vrot.lane.b32.xlu0 %v869, 48
    %v929 = vpop.permute.xlu0 %928
    %932 = vrot.lane.b32.xlu0 %v873, 96
    %v933 = vpop.permute.xlu0 %932
    %936 = vrot.lane.b32.xlu0 %v882, 80
    %v937 = vpop.permute.xlu0 %936
    %v939 = vsel %vm51, %v782, %v885
    %v940 = vsel %vm164, %v939, %v889
    %v941 = vsel %vm588, %v940, %v893
    %v942 = vsel %vm590, %v941, %v897
    %v943 = vsel %vm592, %v942, %v901
    %v944 = vsel %vm594, %v943, %v905
    %v945 = vsel %vm596, %v944, %v909
    %v946 = vsel %vm51, %v834, %v913
    %v947 = vsel %vm164, %v946, %v917
    %v948 = vsel %vm588, %v947, %v921
    %v949 = vsel %vm590, %v948, %v925
    %v950 = vsel %vm592, %v949, %v929
    %v951 = vsel %vm594, %v950, %v933
    %v952 = vsel %vm596, %v951, %v937
    %953 = vrot.lane.b32.xlu0 %v249, 96
    %v954 = vpop.permute.xlu0 %953
    %957 = vrot.lane.b32.xlu0 %v776, 16
    %v958 = vpop.permute.xlu0 %957
    %v960 = vsel %vm51, %v954, %v958
    %s961 = scalar_lea.vmem [#allocation5], 24
    %962 = vst [vmem:[%s961] sm:$0xff] %v945
    %963 = vst [vmem:[%s961 + $0x8] sm:$0xff] %v952
    %964 = vst.msk [vmem:[%s961 + $0x10] sm:$0xff] %vm164, %v960
    %v966 = vsel %vm164, %v254, 0
    %v969 = vsel %vm164, %v141, 0
    %971 = vmatprep.subr.mxu0 0.0
    %972 = vmatpush1.xpose.msra.mxu0 0.0
    %973 = vmatprep.subr.mxu0 0.0
    %974 = vmatpush1.xpose.msra.mxu0 0.0
    %975 = vmatprep.subr.mxu0 0.0
    %976 = vmatpush1.xpose.msra.mxu0 0.0
    %977 = vmatprep.subr.mxu0 0.0
    %978 = vmatpush1.xpose.msra.mxu0 0.0
    %979 = vmatprep.subr.mxu0 0.0
    %980 = vmatpush1.xpose.msra.mxu0 0.0
    %981 = vmatprep.subr.mxu0 0.0
    %982 = vmatpush1.xpose.msra.mxu0 0.0
    %983 = vmatprep.subr.mxu0 0.0
    %984 = vmatpush1.xpose.msra.mxu0 0.0
    %985 = vmatprep.subr.mxu0 0.0
    %986 = vmatpush1.xpose.msra.mxu0 0.0
    %987 = vmatprep.subr.mxu0 0.0
    %988 = vmatpush1.xpose.msra.mxu0 0.0
    %989 = vmatprep.subr.mxu0 0.0
    %990 = vmatpush1.xpose.msra.mxu0 0.0
    %991 = vmatprep.subr.mxu0 0.0
    %992 = vmatpush1.xpose.msra.mxu0 0.0
    %993 = vmatprep.subr.mxu0 0.0
    %994 = vmatpush1.xpose.msra.mxu0 0.0
    %995 = vmatprep.subr.mxu0 0.0
    %996 = vmatpush1.xpose.msra.mxu0 0.0
    %997 = vmatprep.subr.mxu0 0.0
    %998 = vmatpush1.xpose.msra.mxu0 0.0
    %999 = vmatprep.subr.mxu0 0.0
    %1000 = vmatpush1.xpose.msra.mxu0 0.0
    %1001 = vmatprep.subr.mxu0 0.0
    %1002 = vmatpush1.xpose.msra.mxu0 %v969
    %1003 = vmatprep.subr.mxu0 0.0
    %1004 = vmatpush2.xpose.msra.mxu0 0.0
    %1005 = vmatprep.subr.mxu0 0.0
    %1006 = vmatpush2.xpose.msra.mxu0 0.0
    %1007 = vmatprep.subr.mxu0 0.0
    %1008 = vmatpush2.xpose.msra.mxu0 0.0
    %1009 = vmatprep.subr.mxu0 0.0
    %1010 = vmatpush2.xpose.msra.mxu0 0.0
    %1011 = vmatprep.subr.mxu0 0.0
    %1012 = vmatpush2.xpose.msra.mxu0 0.0
    %1013 = vmatprep.subr.mxu0 0.0
    %1014 = vmatpush2.xpose.msra.mxu0 0.0
    %1015 = vmatprep.subr.mxu0 0.0
    %1016 = vmatpush2.xpose.msra.mxu0 0.0
    %1017 = vmatprep.subr.mxu0 0.0
    %1018 = vmatpush2.xpose.msra.mxu0 0.0
    %1019 = vmatprep.subr.mxu0 0.0
    %1020 = vmatpush2.xpose.msra.mxu0 0.0
    %1021 = vmatprep.subr.mxu0 0.0
    %1022 = vmatpush2.xpose.msra.mxu0 0.0
    %1023 = vmatprep.subr.mxu0 0.0
    %1024 = vmatpush2.xpose.msra.mxu0 0.0
    %1025 = vmatprep.subr.mxu0 0.0
    %1026 = vmatpush2.xpose.msra.mxu0 0.0
    %1027 = vmatprep.subr.mxu0 0.0
    %1028 = vmatpush2.xpose.msra.mxu0 0.0
    %1029 = vmatprep.subr.mxu0 0.0
    %1030 = vmatpush2.xpose.msra.mxu0 0.0
    %1031 = vmatprep.subr.mxu0 0.0
    %1032 = vmatpush2.xpose.msra.mxu0 0.0
    %1033 = vmatprep.subr.mxu0 0.0
    %1034 = vmatpush2.xpose.msra.mxu0 0.0
    %1035 = vmatprep.mubr.f32.mxu0 0.0
    %1036 = vmatmul.mubr.f32.gmra.mxu0 %v966
    %v1037 = vpop.f32.mrf.mxu0
    %v1038 = vadd.f32 0.0, %v1037
    %v1039 = vpop.f32.mrf.mxu0
    %1040 = vdwg.mxu0
    %v1041 = vsel %vm338, %v1038, -inf
    %1042 = vmax.xlane.f32.xlu0 %v1041
    %v1043 = vpop.xlane.xlu0 %1042
    %v1044 = vsub.f32 %v1038, %v1043
    %v1045 = vmul.f32 %v1044, 1.442695
    %v1046 = vpow.pop %v1045
    %v1047 = vsel %vm338, %v1046, 0.0
    %1048 = vadd.xlane.f32.xlu0 %v1047
    %v1049 = vpop.xlane.xlu0 %1048
    %v1050 = vrcp.pop %v1049
    %v1051 = vmul.f32 %v1046, %v1050
    %1052 = vrot.lane.b32.xlu0 %v141, 96
    %v1053 = vpop.permute.xlu0 %1052
    %v1056 = vsel %vm338, %v1051, 0
    %1058 = vmatprep.subr.mxu0 0.0
    %1059 = vmatpush1.msra.mxu0 0.0
    %1060 = vmatprep.subr.mxu0 0.0
    %1061 = vmatpush1.msra.mxu0 0.0
    %1062 = vmatprep.subr.mxu0 0.0
    %1063 = vmatpush1.msra.mxu0 0.0
    %1064 = vmatprep.subr.mxu0 0.0
    %1065 = vmatpush1.msra.mxu0 0.0
    %1066 = vmatprep.subr.mxu0 0.0
    %1067 = vmatpush1.msra.mxu0 0.0
    %1068 = vmatprep.subr.mxu0 0.0
    %1069 = vmatpush1.msra.mxu0 0.0
    %1070 = vmatprep.subr.mxu0 0.0
    %1071 = vmatpush1.msra.mxu0 0.0
    %1072 = vmatprep.subr.mxu0 0.0
    %1073 = vmatpush1.msra.mxu0 0.0
    %1074 = vmatprep.subr.mxu0 0.0
    %1075 = vmatpush1.msra.mxu0 0.0
    %1076 = vmatprep.subr.mxu0 0.0
    %1077 = vmatpush1.msra.mxu0 0.0
    %1078 = vmatprep.subr.mxu0 0.0
    %1079 = vmatpush1.msra.mxu0 0.0
    %1080 = vmatprep.subr.mxu0 0.0
    %1081 = vmatpush1.msra.mxu0 0.0
    %1082 = vmatprep.subr.mxu0 0.0
    %1083 = vmatpush1.msra.mxu0 0.0
    %1084 = vmatprep.subr.mxu0 0.0
    %1085 = vmatpush1.msra.mxu0 0.0
    %1086 = vmatprep.subr.mxu0 0.0
    %1087 = vmatpush1.msra.mxu0 0.0
    %1088 = vmatprep.subr.mxu0 0.0
    %1089 = vmatpush1.msra.mxu0 %v1053
    %1090 = vmatprep.subr.mxu0 0.0
    %1091 = vmatpush2.msra.mxu0 0.0
    %1092 = vmatprep.subr.mxu0 0.0
    %1093 = vmatpush2.msra.mxu0 0.0
    %1094 = vmatprep.subr.mxu0 0.0
    %1095 = vmatpush2.msra.mxu0 0.0
    %1096 = vmatprep.subr.mxu0 0.0
    %1097 = vmatpush2.msra.mxu0 0.0
    %1098 = vmatprep.subr.mxu0 0.0
    %1099 = vmatpush2.msra.mxu0 0.0
    %1100 = vmatprep.subr.mxu0 0.0
    %1101 = vmatpush2.msra.mxu0 0.0
    %1102 = vmatprep.subr.mxu0 0.0
    %1103 = vmatpush2.msra.mxu0 0.0
    %1104 = vmatprep.subr.mxu0 0.0
    %1105 = vmatpush2.msra.mxu0 0.0
    %1106 = vmatprep.subr.mxu0 0.0
    %1107 = vmatpush2.msra.mxu0 0.0
    %1108 = vmatprep.subr.mxu0 0.0
    %1109 = vmatpush2.msra.mxu0 0.0
    %1110 = vmatprep.subr.mxu0 0.0
    %1111 = vmatpush2.msra.mxu0 0.0
    %1112 = vmatprep.subr.mxu0 0.0
    %1113 = vmatpush2.msra.mxu0 0.0
    %1114 = vmatprep.subr.mxu0 0.0
    %1115 = vmatpush2.msra.mxu0 0.0
    %1116 = vmatprep.subr.mxu0 0.0
    %1117 = vmatpush2.msra.mxu0 0.0
    %1118 = vmatprep.subr.mxu0 0.0
    %1119 = vmatpush2.msra.mxu0 0.0
    %1120 = vmatprep.subr.mxu0 0.0
    %1121 = vmatpush2.msra.mxu0 0.0
    %1122 = vmatprep.mubr.f32.mxu0 0.0
    %1123 = vmatmul.mubr.f32.gmra.mxu0 %v1056
    %v1124 = vpop.f32.mrf.mxu0
    %v1125 = vadd.f32 0.0, %v1124
    %v1126 = vpop.f32.mrf.mxu0
    %1127 = vdwg.mxu0
    %v1128 = vlaneseq
    %v1129 = vshrl.u32 %v1128, 7
    %v1130 = vsub.s32 0, %v1129
    %v1131 = vrot.slane %v40, %v1130
    %1132 = vset.pattern.permute.xlu0 0
    %1133 = vperm.xlu0 %1132, %v1051
    %v1134 = vpop.permute.xlu0 %1133
    %v1136 = vlaneseq
    %v1137 = vshrl.u32 %v1136, 7
    %v1138 = vsub.s32 0, %v1137
    %v1139 = vrot.slane %v141, %v1138
    %v1140 = vmul.f32 %v1134, %v1139
    %v1141 = vlaneseq
    %v1142 = vshrl.u32 %v1141, 7
    %v1143 = vsub.s32 1, %v1142
    %v1144 = vrot.slane %v40, %v1143
    %1145 = vset.pattern.permute.xlu0 1
    %1146 = vperm.xlu0 %1145, %v1051
    %v1147 = vpop.permute.xlu0 %1146
    %v1149 = vlaneseq
    %v1150 = vshrl.u32 %v1149, 7
    %v1151 = vsub.s32 1, %v1150
    %v1152 = vrot.slane %v141, %v1151
    %v1153 = vmul.f32 %v1147, %v1152
    %v1154 = vlaneseq
    %v1155 = vshrl.u32 %v1154, 7
    %v1156 = vsub.s32 2, %v1155
    %v1157 = vrot.slane %v40, %v1156
    %1158 = vset.pattern.permute.xlu0 2
    %1159 = vperm.xlu0 %1158, %v1051
    %v1160 = vpop.permute.xlu0 %1159
    %v1162 = vlaneseq
    %v1163 = vshrl.u32 %v1162, 7
    %v1164 = vsub.s32 2, %v1163
    %v1165 = vrot.slane %v141, %v1164
    %v1166 = vmul.f32 %v1160, %v1165
    %v1167 = vlaneseq
    %v1168 = vshrl.u32 %v1167, 7
    %v1169 = vsub.s32 3, %v1168
    %v1170 = vrot.slane %v40, %v1169
    %1171 = vset.pattern.permute.xlu0 3
    %1172 = vperm.xlu0 %1171, %v1051
    %v1173 = vpop.permute.xlu0 %1172
    %v1175 = vlaneseq
    %v1176 = vshrl.u32 %v1175, 7
    %v1177 = vsub.s32 3, %v1176
    %v1178 = vrot.slane %v141, %v1177
    %v1179 = vmul.f32 %v1173, %v1178
    %v1180 = vlaneseq
    %v1181 = vshrl.u32 %v1180, 7
    %v1182 = vsub.s32 4, %v1181
    %v1183 = vrot.slane %v40, %v1182
    %1184 = vset.pattern.permute.xlu0 4
    %1185 = vperm.xlu0 %1184, %v1051
    %v1186 = vpop.permute.xlu0 %1185
    %v1188 = vlaneseq
    %v1189 = vshrl.u32 %v1188, 7
    %v1190 = vsub.s32 4, %v1189
    %v1191 = vrot.slane %v141, %v1190
    %v1192 = vmul.f32 %v1186, %v1191
    %v1193 = vlaneseq
    %v1194 = vshrl.u32 %v1193, 7
    %v1195 = vsub.s32 5, %v1194
    %v1196 = vrot.slane %v40, %v1195
    %1197 = vset.pattern.permute.xlu0 5
    %1198 = vperm.xlu0 %1197, %v1051
    %v1199 = vpop.permute.xlu0 %1198
    %v1201 = vlaneseq
    %v1202 = vshrl.u32 %v1201, 7
    %v1203 = vsub.s32 5, %v1202
    %v1204 = vrot.slane %v141, %v1203
    %v1205 = vmul.f32 %v1199, %v1204
    %v1206 = vlaneseq
    %v1207 = vshrl.u32 %v1206, 7
    %v1208 = vsub.s32 6, %v1207
    %v1209 = vrot.slane %v40, %v1208
    %1210 = vset.pattern.permute.xlu0 6
    %1211 = vperm.xlu0 %1210, %v1051
    %v1212 = vpop.permute.xlu0 %1211
    %v1214 = vlaneseq
    %v1215 = vshrl.u32 %v1214, 7
    %v1216 = vsub.s32 6, %v1215
    %v1217 = vrot.slane %v141, %v1216
    %v1218 = vmul.f32 %v1212, %v1217
    %v1219 = vlaneseq
    %v1220 = vshrl.u32 %v1219, 7
    %v1221 = vsub.s32 7, %v1220
    %v1222 = vrot.slane %v40, %v1221
    %1223 = vset.pattern.permute.xlu0 7
    %1224 = vperm.xlu0 %1223, %v1051
    %v1225 = vpop.permute.xlu0 %1224
    %v1227 = vlaneseq
    %v1228 = vshrl.u32 %v1227, 7
    %v1229 = vsub.s32 7, %v1228
    %v1230 = vrot.slane %v141, %v1229
    %v1231 = vmul.f32 %v1225, %v1230
    %1233 = vrot.lane.b32.xlu0 %v1140, 112
    %v1234 = vpop.permute.xlu0 %1233
    %1237 = vrot.lane.b32.xlu0 %v1144, 32
    %v1238 = vpop.permute.xlu0 %1237
    %1241 = vrot.lane.b32.xlu0 %v1153, 16
    %v1242 = vpop.permute.xlu0 %1241
    %1245 = vrot.lane.b32.xlu0 %v1157, 64
    %v1246 = vpop.permute.xlu0 %1245
    %1249 = vrot.lane.b32.xlu0 %v1166, 48
    %v1250 = vpop.permute.xlu0 %1249
    %1253 = vrot.lane.b32.xlu0 %v1170, 96
    %v1254 = vpop.permute.xlu0 %1253
    %1257 = vrot.lane.b32.xlu0 %v1179, 80
    %v1258 = vpop.permute.xlu0 %1257
    %1261 = vrot.lane.b32.xlu0 %v1192, 112
    %v1262 = vpop.permute.xlu0 %1261
    %1265 = vrot.lane.b32.xlu0 %v1196, 32
    %v1266 = vpop.permute.xlu0 %1265
    %1269 = vrot.lane.b32.xlu0 %v1205, 16
    %v1270 = vpop.permute.xlu0 %1269
    %1273 = vrot.lane.b32.xlu0 %v1209, 64
    %v1274 = vpop.permute.xlu0 %1273
    %1277 = vrot.lane.b32.xlu0 %v1218, 48
    %v1278 = vpop.permute.xlu0 %1277
    %1281 = vrot.lane.b32.xlu0 %v1222, 96
    %v1282 = vpop.permute.xlu0 %1281
    %1285 = vrot.lane.b32.xlu0 %v1231, 80
    %v1286 = vpop.permute.xlu0 %1285
    %v1288 = vsel %vm51, %v1131, %v1234
    %v1289 = vsel %vm164, %v1288, %v1238
    %v1290 = vsel %vm588, %v1289, %v1242
    %v1291 = vsel %vm590, %v1290, %v1246
    %v1292 = vsel %vm592, %v1291, %v1250
    %v1293 = vsel %vm594, %v1292, %v1254
    %v1294 = vsel %vm596, %v1293, %v1258
    %v1295 = vsel %vm51, %v1183, %v1262
    %v1296 = vsel %vm164, %v1295, %v1266
    %v1297 = vsel %vm588, %v1296, %v1270
    %v1298 = vsel %vm590, %v1297, %v1274
    %v1299 = vsel %vm592, %v1298, %v1278
    %v1300 = vsel %vm594, %v1299, %v1282
    %v1301 = vsel %vm596, %v1300, %v1286
    %1302 = vrot.lane.b32.xlu0 %v254, 96
    %v1303 = vpop.permute.xlu0 %1302
    %1306 = vrot.lane.b32.xlu0 %v1125, 16
    %v1307 = vpop.permute.xlu0 %1306
    %v1309 = vsel %vm51, %v1303, %v1307
    %s1310 = scalar_lea.vmem [#allocation5], 48
    %1311 = vst [vmem:[%s1310] sm:$0xff] %v1294
    %1312 = vst [vmem:[%s1310 + $0x8] sm:$0xff] %v1301
    %1313 = vst.msk [vmem:[%s1310 + $0x10] sm:$0xff] %vm164, %v1309
    %v1315 = vsel %vm164, %v259, 0
    %v1318 = vsel %vm164, %v146, 0
    %1320 = vmatprep.subr.mxu0 0.0
    %1321 = vmatpush1.xpose.msra.mxu0 0.0
    %1322 = vmatprep.subr.mxu0 0.0
    %1323 = vmatpush1.xpose.msra.mxu0 0.0
    %1324 = vmatprep.subr.mxu0 0.0
    %1325 = vmatpush1.xpose.msra.mxu0 0.0
    %1326 = vmatprep.subr.mxu0 0.0
    %1327 = vmatpush1.xpose.msra.mxu0 0.0
    %1328 = vmatprep.subr.mxu0 0.0
    %1329 = vmatpush1.xpose.msra.mxu0 0.0
    %1330 = vmatprep.subr.mxu0 0.0
    %1331 = vmatpush1.xpose.msra.mxu0 0.0
    %1332 = vmatprep.subr.mxu0 0.0
    %1333 = vmatpush1.xpose.msra.mxu0 0.0
    %1334 = vmatprep.subr.mxu0 0.0
    %1335 = vmatpush1.xpose.msra.mxu0 0.0
    %1336 = vmatprep.subr.mxu0 0.0
    %1337 = vmatpush1.xpose.msra.mxu0 0.0
    %1338 = vmatprep.subr.mxu0 0.0
    %1339 = vmatpush1.xpose.msra.mxu0 0.0
    %1340 = vmatprep.subr.mxu0 0.0
    %1341 = vmatpush1.xpose.msra.mxu0 0.0
    %1342 = vmatprep.subr.mxu0 0.0
    %1343 = vmatpush1.xpose.msra.mxu0 0.0
    %1344 = vmatprep.subr.mxu0 0.0
    %1345 = vmatpush1.xpose.msra.mxu0 0.0
    %1346 = vmatprep.subr.mxu0 0.0
    %1347 = vmatpush1.xpose.msra.mxu0 0.0
    %1348 = vmatprep.subr.mxu0 0.0
    %1349 = vmatpush1.xpose.msra.mxu0 0.0
    %1350 = vmatprep.subr.mxu0 0.0
    %1351 = vmatpush1.xpose.msra.mxu0 %v1318
    %1352 = vmatprep.subr.mxu0 0.0
    %1353 = vmatpush2.xpose.msra.mxu0 0.0
    %1354 = vmatprep.subr.mxu0 0.0
    %1355 = vmatpush2.xpose.msra.mxu0 0.0
    %1356 = vmatprep.subr.mxu0 0.0
    %1357 = vmatpush2.xpose.msra.mxu0 0.0
    %1358 = vmatprep.subr.mxu0 0.0
    %1359 = vmatpush2.xpose.msra.mxu0 0.0
    %1360 = vmatprep.subr.mxu0 0.0
    %1361 = vmatpush2.xpose.msra.mxu0 0.0
    %1362 = vmatprep.subr.mxu0 0.0
    %1363 = vmatpush2.xpose.msra.mxu0 0.0
    %1364 = vmatprep.subr.mxu0 0.0
    %1365 = vmatpush2.xpose.msra.mxu0 0.0
    %1366 = vmatprep.subr.mxu0 0.0
    %1367 = vmatpush2.xpose.msra.mxu0 0.0
    %1368 = vmatprep.subr.mxu0 0.0
    %1369 = vmatpush2.xpose.msra.mxu0 0.0
    %1370 = vmatprep.subr.mxu0 0.0
    %1371 = vmatpush2.xpose.msra.mxu0 0.0
    %1372 = vmatprep.subr.mxu0 0.0
    %1373 = vmatpush2.xpose.msra.mxu0 0.0
    %1374 = vmatprep.subr.mxu0 0.0
    %1375 = vmatpush2.xpose.msra.mxu0 0.0
    %1376 = vmatprep.subr.mxu0 0.0
    %1377 = vmatpush2.xpose.msra.mxu0 0.0
    %1378 = vmatprep.subr.mxu0 0.0
    %1379 = vmatpush2.xpose.msra.mxu0 0.0
    %1380 = vmatprep.subr.mxu0 0.0
    %1381 = vmatpush2.xpose.msra.mxu0 0.0
    %1382 = vmatprep.subr.mxu0 0.0
    %1383 = vmatpush2.xpose.msra.mxu0 0.0
    %1384 = vmatprep.mubr.f32.mxu0 0.0
    %1385 = vmatmul.mubr.f32.gmra.mxu0 %v1315
    %v1386 = vpop.f32.mrf.mxu0
    %v1387 = vadd.f32 0.0, %v1386
    %v1388 = vpop.f32.mrf.mxu0
    %1389 = vdwg.mxu0
    %v1390 = vsel %vm338, %v1387, -inf
    %1391 = vmax.xlane.f32.xlu0 %v1390
    %v1392 = vpop.xlane.xlu0 %1391
    %v1393 = vsub.f32 %v1387, %v1392
    %v1394 = vmul.f32 %v1393, 1.442695
    %v1395 = vpow.pop %v1394
    %v1396 = vsel %vm338, %v1395, 0.0
    %1397 = vadd.xlane.f32.xlu0 %v1396
    %v1398 = vpop.xlane.xlu0 %1397
    %v1399 = vrcp.pop %v1398
    %v1400 = vmul.f32 %v1395, %v1399
    %1401 = vrot.lane.b32.xlu0 %v146, 96
    %v1402 = vpop.permute.xlu0 %1401
    %v1405 = vsel %vm338, %v1400, 0
    %1407 = vmatprep.subr.mxu0 0.0
    %1408 = vmatpush1.msra.mxu0 0.0
    %1409 = vmatprep.subr.mxu0 0.0
    %1410 = vmatpush1.msra.mxu0 0.0
    %1411 = vmatprep.subr.mxu0 0.0
    %1412 = vmatpush1.msra.mxu0 0.0
    %1413 = vmatprep.subr.mxu0 0.0
    %1414 = vmatpush1.msra.mxu0 0.0
    %1415 = vmatprep.subr.mxu0 0.0
    %1416 = vmatpush1.msra.mxu0 0.0
    %1417 = vmatprep.subr.mxu0 0.0
    %1418 = vmatpush1.msra.mxu0 0.0
    %1419 = vmatprep.subr.mxu0 0.0
    %1420 = vmatpush1.msra.mxu0 0.0
    %1421 = vmatprep.subr.mxu0 0.0
    %1422 = vmatpush1.msra.mxu0 0.0
    %1423 = vmatprep.subr.mxu0 0.0
    %1424 = vmatpush1.msra.mxu0 0.0
    %1425 = vmatprep.subr.mxu0 0.0
    %1426 = vmatpush1.msra.mxu0 0.0
    %1427 = vmatprep.subr.mxu0 0.0
    %1428 = vmatpush1.msra.mxu0 0.0
    %1429 = vmatprep.subr.mxu0 0.0
    %1430 = vmatpush1.msra.mxu0 0.0
    %1431 = vmatprep.subr.mxu0 0.0
    %1432 = vmatpush1.msra.mxu0 0.0
    %1433 = vmatprep.subr.mxu0 0.0
    %1434 = vmatpush1.msra.mxu0 0.0
    %1435 = vmatprep.subr.mxu0 0.0
    %1436 = vmatpush1.msra.mxu0 0.0
    %1437 = vmatprep.subr.mxu0 0.0
    %1438 = vmatpush1.msra.mxu0 %v1402
    %1439 = vmatprep.subr.mxu0 0.0
    %1440 = vmatpush2.msra.mxu0 0.0
    %1441 = vmatprep.subr.mxu0 0.0
    %1442 = vmatpush2.msra.mxu0 0.0
    %1443 = vmatprep.subr.mxu0 0.0
    %1444 = vmatpush2.msra.mxu0 0.0
    %1445 = vmatprep.subr.mxu0 0.0
    %1446 = vmatpush2.msra.mxu0 0.0
    %1447 = vmatprep.subr.mxu0 0.0
    %1448 = vmatpush2.msra.mxu0 0.0
    %1449 = vmatprep.subr.mxu0 0.0
    %1450 = vmatpush2.msra.mxu0 0.0
    %1451 = vmatprep.subr.mxu0 0.0
    %1452 = vmatpush2.msra.mxu0 0.0
    %1453 = vmatprep.subr.mxu0 0.0
    %1454 = vmatpush2.msra.mxu0 0.0
    %1455 = vmatprep.subr.mxu0 0.0
    %1456 = vmatpush2.msra.mxu0 0.0
    %1457 = vmatprep.subr.mxu0 0.0
    %1458 = vmatpush2.msra.mxu0 0.0
    %1459 = vmatprep.subr.mxu0 0.0
    %1460 = vmatpush2.msra.mxu0 0.0
    %1461 = vmatprep.subr.mxu0 0.0
    %1462 = vmatpush2.msra.mxu0 0.0
    %1463 = vmatprep.subr.mxu0 0.0
    %1464 = vmatpush2.msra.mxu0 0.0
    %1465 = vmatprep.subr.mxu0 0.0
    %1466 = vmatpush2.msra.mxu0 0.0
    %1467 = vmatprep.subr.mxu0 0.0
    %1468 = vmatpush2.msra.mxu0 0.0
    %1469 = vmatprep.subr.mxu0 0.0
    %1470 = vmatpush2.msra.mxu0 0.0
    %1471 = vmatprep.mubr.f32.mxu0 0.0
    %1472 = vmatmul.mubr.f32.gmra.mxu0 %v1405
    %v1473 = vpop.f32.mrf.mxu0
    %v1474 = vadd.f32 0.0, %v1473
    %v1475 = vpop.f32.mrf.mxu0
    %1476 = vdwg.mxu0
    %v1477 = vlaneseq
    %v1478 = vshrl.u32 %v1477, 7
    %v1479 = vsub.s32 0, %v1478
    %v1480 = vrot.slane %v41, %v1479
    %1481 = vset.pattern.permute.xlu0 0
    %1482 = vperm.xlu0 %1481, %v1400
    %v1483 = vpop.permute.xlu0 %1482
    %v1485 = vlaneseq
    %v1486 = vshrl.u32 %v1485, 7
    %v1487 = vsub.s32 0, %v1486
    %v1488 = vrot.slane %v146, %v1487
    %v1489 = vmul.f32 %v1483, %v1488
    %v1490 = vlaneseq
    %v1491 = vshrl.u32 %v1490, 7
    %v1492 = vsub.s32 1, %v1491
    %v1493 = vrot.slane %v41, %v1492
    %1494 = vset.pattern.permute.xlu0 1
    %1495 = vperm.xlu0 %1494, %v1400
    %v1496 = vpop.permute.xlu0 %1495
    %v1498 = vlaneseq
    %v1499 = vshrl.u32 %v1498, 7
    %v1500 = vsub.s32 1, %v1499
    %v1501 = vrot.slane %v146, %v1500
    %v1502 = vmul.f32 %v1496, %v1501
    %v1503 = vlaneseq
    %v1504 = vshrl.u32 %v1503, 7
    %v1505 = vsub.s32 2, %v1504
    %v1506 = vrot.slane %v41, %v1505
    %1507 = vset.pattern.permute.xlu0 2
    %1508 = vperm.xlu0 %1507, %v1400
    %v1509 = vpop.permute.xlu0 %1508
    %v1511 = vlaneseq
    %v1512 = vshrl.u32 %v1511, 7
    %v1513 = vsub.s32 2, %v1512
    %v1514 = vrot.slane %v146, %v1513
    %v1515 = vmul.f32 %v1509, %v1514
    %v1516 = vlaneseq
    %v1517 = vshrl.u32 %v1516, 7
    %v1518 = vsub.s32 3, %v1517
    %v1519 = vrot.slane %v41, %v1518
    %1520 = vset.pattern.permute.xlu0 3
    %1521 = vperm.xlu0 %1520, %v1400
    %v1522 = vpop.permute.xlu0 %1521
    %v1524 = vlaneseq
    %v1525 = vshrl.u32 %v1524, 7
    %v1526 = vsub.s32 3, %v1525
    %v1527 = vrot.slane %v146, %v1526
    %v1528 = vmul.f32 %v1522, %v1527
    %v1529 = vlaneseq
    %v1530 = vshrl.u32 %v1529, 7
    %v1531 = vsub.s32 4, %v1530
    %v1532 = vrot.slane %v41, %v1531
    %1533 = vset.pattern.permute.xlu0 4
    %1534 = vperm.xlu0 %1533, %v1400
    %v1535 = vpop.permute.xlu0 %1534
    %v1537 = vlaneseq
    %v1538 = vshrl.u32 %v1537, 7
    %v1539 = vsub.s32 4, %v1538
    %v1540 = vrot.slane %v146, %v1539
    %v1541 = vmul.f32 %v1535, %v1540
    %v1542 = vlaneseq
    %v1543 = vshrl.u32 %v1542, 7
    %v1544 = vsub.s32 5, %v1543
    %v1545 = vrot.slane %v41, %v1544
    %1546 = vset.pattern.permute.xlu0 5
    %1547 = vperm.xlu0 %1546, %v1400
    %v1548 = vpop.permute.xlu0 %1547
    %v1550 = vlaneseq
    %v1551 = vshrl.u32 %v1550, 7
    %v1552 = vsub.s32 5, %v1551
    %v1553 = vrot.slane %v146, %v1552
    %v1554 = vmul.f32 %v1548, %v1553
    %v1555 = vlaneseq
    %v1556 = vshrl.u32 %v1555, 7
    %v1557 = vsub.s32 6, %v1556
    %v1558 = vrot.slane %v41, %v1557
    %1559 = vset.pattern.permute.xlu0 6
    %1560 = vperm.xlu0 %1559, %v1400
    %v1561 = vpop.permute.xlu0 %1560
    %v1563 = vlaneseq
    %v1564 = vshrl.u32 %v1563, 7
    %v1565 = vsub.s32 6, %v1564
    %v1566 = vrot.slane %v146, %v1565
    %v1567 = vmul.f32 %v1561, %v1566
    %v1568 = vlaneseq
    %v1569 = vshrl.u32 %v1568, 7
    %v1570 = vsub.s32 7, %v1569
    %v1571 = vrot.slane %v41, %v1570
    %1572 = vset.pattern.permute.xlu0 7
    %1573 = vperm.xlu0 %1572, %v1400
    %v1574 = vpop.permute.xlu0 %1573
    %v1576 = vlaneseq
    %v1577 = vshrl.u32 %v1576, 7
    %v1578 = vsub.s32 7, %v1577
    %v1579 = vrot.slane %v146, %v1578
    %v1580 = vmul.f32 %v1574, %v1579
    %1582 = vrot.lane.b32.xlu0 %v1489, 112
    %v1583 = vpop.permute.xlu0 %1582
    %1586 = vrot.lane.b32.xlu0 %v1493, 32
    %v1587 = vpop.permute.xlu0 %1586
    %1590 = vrot.lane.b32.xlu0 %v1502, 16
    %v1591 = vpop.permute.xlu0 %1590
    %1594 = vrot.lane.b32.xlu0 %v1506, 64
    %v1595 = vpop.permute.xlu0 %1594
    %1598 = vrot.lane.b32.xlu0 %v1515, 48
    %v1599 = vpop.permute.xlu0 %1598
    %1602 = vrot.lane.b32.xlu0 %v1519, 96
    %v1603 = vpop.permute.xlu0 %1602
    %1606 = vrot.lane.b32.xlu0 %v1528, 80
    %v1607 = vpop.permute.xlu0 %1606
    %1610 = vrot.lane.b32.xlu0 %v1541, 112
    %v1611 = vpop.permute.xlu0 %1610
    %1614 = vrot.lane.b32.xlu0 %v1545, 32
    %v1615 = vpop.permute.xlu0 %1614
    %1618 = vrot.lane.b32.xlu0 %v1554, 16
    %v1619 = vpop.permute.xlu0 %1618
    %1622 = vrot.lane.b32.xlu0 %v1558, 64
    %v1623 = vpop.permute.xlu0 %1622
    %1626 = vrot.lane.b32.xlu0 %v1567, 48
    %v1627 = vpop.permute.xlu0 %1626
    %1630 = vrot.lane.b32.xlu0 %v1571, 96
    %v1631 = vpop.permute.xlu0 %1630
    %1634 = vrot.lane.b32.xlu0 %v1580, 80
    %v1635 = vpop.permute.xlu0 %1634
    %v1637 = vsel %vm51, %v1480, %v1583
    %v1638 = vsel %vm164, %v1637, %v1587
    %v1639 = vsel %vm588, %v1638, %v1591
    %v1640 = vsel %vm590, %v1639, %v1595
    %v1641 = vsel %vm592, %v1640, %v1599
    %v1642 = vsel %vm594, %v1641, %v1603
    %v1643 = vsel %vm596, %v1642, %v1607
    %v1644 = vsel %vm51, %v1532, %v1611
    %v1645 = vsel %vm164, %v1644, %v1615
    %v1646 = vsel %vm588, %v1645, %v1619
    %v1647 = vsel %vm590, %v1646, %v1623
    %v1648 = vsel %vm592, %v1647, %v1627
    %v1649 = vsel %vm594, %v1648, %v1631
    %v1650 = vsel %vm596, %v1649, %v1635
    %1651 = vrot.lane.b32.xlu0 %v259, 96
    %v1652 = vpop.permute.xlu0 %1651
    %1655 = vrot.lane.b32.xlu0 %v1474, 16
    %v1656 = vpop.permute.xlu0 %1655
    %v1658 = vsel %vm51, %v1652, %v1656
    %s1659 = scalar_lea.vmem [#allocation5], 72
    %1660 = vst [vmem:[%s1659] sm:$0xff] %v1643
    %1661 = vst [vmem:[%s1659 + $0x8] sm:$0xff] %v1650
    %1662 = vst.msk [vmem:[%s1659 + $0x10] sm:$0xff] %vm164, %v1658
    // Predicated region
    $region30: #{tpu_custom_call.1} parent=1 // pred_check
      _
    $region31: #{tpu_custom_call.1} parent=1 // pred_check_branch
      %1664 = sbr.rel (0) target = $region33
    $region32: #{tpu_custom_call.1} parent=1 // pred_region
      %s1666 = ssub.s32 1536, 1536
      %1667 = vsyncadd [#allocation4], %s1666
      %s1668 = sshll.u32 [#allocation5], 4
      %s1669 = int_to_ptr.vmem [resolvable:$true] %s1668
      %1674 = dma.vmem_to_hbm [thread:$0]  %s1669, 1536, %s6, [#allocation4], 384, 384, 24
    $region33: #{tpu_custom_call.1} parent=1 // pred_fallthru
      _
    // Predicated region
    $region34: #{tpu_custom_call.1} parent=1 // pred_check
      _
    $region35: #{tpu_custom_call.1} parent=1 // pred_check_branch
      %1676 = sbr.rel (0) target = $region37
    $region36: #{tpu_custom_call.1} parent=1 // pred_region
      %1677 = dma.done [#allocation4], 1536
    $region37: #{tpu_custom_call.1} parent=1 // pred_fallthru
      _
    %1678 = vsyncpa [#allocation3], 1
    %1679 = vsyncpa [#allocation4], 1

</llo_original>
